<compile_context>
chip_gen: v5e
topology: v5e:2x2
jax: 0.10.0
libtpu: 0.0.40
codegen_flags: <defaults>
</compile_context>

<pallas_src>
import functools

import jax
import jax.numpy as jnp
from jax.experimental import pallas as pl
from jax.experimental.pallas import tpu as pltpu


def _round_up(x, m):
    return ((x + m - 1) // m) * m


def _attention_conv_kernel(x_ref, w_ref, rel_ref, o_ref, *, bh, W, Wq, ks, pad,
                           C, lead, cdt, mxu_bf16):
    """One (batch, row-block) grid step.

    x_ref:   (1, 1, R_in, Cin)  zero-padded input rows for this block, flattened
             row-major over (bh + 2*pad, Wq), with `lead` leading zero rows (so
             the q-slice start is sublane-aligned) and >= ks-1 trailing zero rows
             (so junk-column window reads stay in bounds).
    w_ref:   (Cin, 3*C)         concatenated [Wq | Wk | Wv] 1x1-conv weights.
    rel_ref: (ks*ks, C)         rel[di*ks + dj, c] positional table.
    o_ref:   (1, bh, W, C)      only the valid output pixels (junk layout columns
                                are computed in VMEM but never written to HBM).
    """
    L = bh * Wq                        # flat pixels computed per block (incl. junk cols)
    span = (ks - 1) * Wq + L           # rows needed by one dj-shifted k/v copy
    q0 = lead + pad * Wq + pad         # multiple of 8 by construction of `lead`

    xp = x_ref[0, 0]                                               # (R_in, Cin)
    w = w_ref[...]
    if mxu_bf16:
        xp = xp.astype(jnp.bfloat16)
        w = w.astype(jnp.bfloat16)
    # All three 1x1 convs as one MXU contraction; conv(pad(x)) == pad(conv(x))
    # because bias=False, so the zero border IS the padded k/v feature map.
    qkv = jnp.dot(xp, w, preferred_element_type=jnp.float32)      # (R_in, 3C) f32

    q = qkv[q0:q0 + L, 0:C].astype(cdt)                           # aligned slice
    rel_all = rel_ref[...].astype(cdt)                            # (ks*ks, C)

    # One shifted copy of k and v per window column dj (2*ks copies).  Every
    # per-(di, dj) window view below is then an 8-aligned subslice (di*Wq is a
    # multiple of 8) instead of a sublane-misaligned slice.
    k_dj = [qkv[lead + dj:lead + dj + span, C:2 * C].astype(cdt) for dj in range(ks)]
    v_dj = [qkv[lead + dj:lead + dj + span, 2 * C:3 * C].astype(cdt) for dj in range(ks)]

    def logit(di, dj):
        kw = k_dj[dj][di * Wq:di * Wq + L, :]
        idx = di * ks + dj
        return q * (kw + rel_all[idx:idx + 1, :])                 # (1,C)-sourced bcast

    # ---- pass 1: running per-(pixel, channel) max over the ks*ks window ------
    m = None
    for di in range(ks):
        for dj in range(ks):
            lg = logit(di, dj)
            m = lg if m is None else jnp.maximum(m, lg)

    # ---- pass 2: recompute logits, accumulate denominator + weighted values --
    # (f32 accumulators; the elementwise math stays in `cdt`.)
    den = None
    acc = None
    for di in range(ks):
        for dj in range(ks):
            e = jnp.exp(logit(di, dj) - m)                        # cdt
            ev = e * v_dj[dj][di * Wq:di * Wq + L, :]             # cdt
            if den is None:
                den = e.astype(jnp.float32)
                acc = ev.astype(jnp.float32)
            else:
                den = den + e                                     # promotes to f32
                acc = acc + ev

    # Drop the junk layout columns before normalizing/storing: only the W valid
    # columns per row reach HBM (lane-dense C stays the last dim).
    acc = acc.reshape(bh, Wq, C)[:, :W, :]
    den = den.reshape(bh, Wq, C)[:, :W, :]
    o_ref[0] = (acc * pl.reciprocal(den, approx=True)).astype(o_ref.dtype)


def _estimate_block_vmem(bh, Wq, Cin, C, ks, pad, cb):
    """Rough per-grid-step live-VMEM estimate (bytes) for the kernel above."""
    L = bh * Wq
    span = (ks - 1) * Wq + L
    r_in = _round_up(8 + (bh + 2 * pad) * Wq + max(ks - 1, 0), 8)
    est = 0
    est += 2 * r_in * Cin * 4                 # double-buffered input block
    est += r_in * 3 * C * 4                   # qkv (f32)
    est += L * C * cb                         # q
    est += 2 * ks * span * C * cb             # per-dj shifted k / v copies
    est += L * C * cb                         # running max
    est += 2 * L * C * 4                      # den + acc (f32)
    est += 3 * L * C * cb                     # transient elementwise temporaries
    est += 2 * bh * Wq * C * 4                # double-buffered output block (upper bound)
    return est


def _pick_block_rows(H, Wq, Cin, C, ks, pad, cb, vmem_budget):
    """Largest divisor of H whose working set fits the budget; prefer >= 2 row
    blocks so the (batch, row-block) grid actually software-pipelines."""
    feasible = [d for d in range(1, H + 1)
                if H % d == 0
                and _estimate_block_vmem(d, Wq, Cin, C, ks, pad, cb) <= vmem_budget]
    if not feasible:
        return 1
    multi = [d for d in feasible if d < H]
    return max(multi) if multi else max(feasible)


def _default_compute_dtype():
    """bf16 elementwise only where the VPU/EUP are bf16-capable (v6e / v7x)."""
    try:
        kind = jax.devices()[0].device_kind.lower()
    except Exception:
        return jnp.float32
    if any(tag in kind for tag in ("v6", "v7", "7x")):
        return jnp.bfloat16
    return jnp.float32


def attention_conv_forward(x, wq, wk, wv, rel_h, rel_w, *, kernel_size,
                           stride=1, padding=0, groups=1, compute_dtype=None,
                           vmem_budget_bytes=8 * 1024 * 1024):
    """x: (B, Cin, H, W) NCHW float32; wq/wk/wv: (Cin, Cout). Returns (B, Cout, H, W)."""
    B, Cin, H, W = x.shape
    C = wq.shape[1]
    ks, pad = kernel_size, padding
    assert C % groups == 0, "out_channels should be divided by groups"
    assert C % 2 == 0
    # TODO(synk): only the stride=1 / 'same'-padding configuration is supported;
    # the reference module's own .view(b, g, C//g, H, W, -1) requires it anyway.
    assert stride == 1 and 2 * pad == ks - 1

    cdt = _default_compute_dtype() if compute_dtype is None else compute_dtype
    cb = jnp.dtype(cdt).itemsize
    mxu_bf16 = (jnp.dtype(cdt) == jnp.dtype(jnp.bfloat16)) and (Cin >= 64)

    # Layout: pad to (H + 2*pad) rows and Wq = round_up(W + 2*pad, 8) columns so
    # the di*Wq window-row offsets are sublane-aligned; `lead` zero rows align the
    # q-slice start; >= ks-1 trailing zero rows keep junk-column reads in bounds.
    Wq = _round_up(W + 2 * pad, 8)
    lead = (-(pad * Wq + pad)) % 8
    bh = _pick_block_rows(H, Wq, Cin, C, ks, pad, cb, vmem_budget_bytes)
    n_blocks = H // bh
    r_core = lead + (bh + 2 * pad) * Wq
    R_in = _round_up(r_core + max(ks - 1, 0), 8)
    tail = R_in - r_core

    # NCHW -> channels-last, zero pad to (Hp, Wq), then pre-pack overlapping
    # (halo) row blocks so both grid axes stay "parallel" with plain BlockSpecs.
    xt = jnp.transpose(x, (0, 2, 3, 1))                               # (B, H, W, Cin)
    xpad = jnp.pad(xt, ((0, 0), (pad, pad), (pad, Wq - W - pad), (0, 0)))
    row_idx = jnp.arange(n_blocks)[:, None] * bh + jnp.arange(bh + 2 * pad)[None, :]
    xb = xpad[:, row_idx]                                             # (B,nb,bh+2p,Wq,Cin)
    xb = xb.reshape(B, n_blocks, (bh + 2 * pad) * Wq, Cin)
    xb = jnp.pad(xb, ((0, 0), (0, 0), (lead, tail), (0, 0)))          # (B,nb,R_in,Cin)

    # Fold the three 1x1 convs into one weight (single MXU contraction in-kernel).
    wqkv = jnp.concatenate([wq, wk, wv], axis=1)                      # (Cin, 3C)

    # Positional table rel[di*ks+dj, c]: first half channels use rel_h[c, di],
    # second half use rel_w[c - C/2, dj] (matches torch.cat((kh+rel_h, kw+rel_w))).
    C2 = C // 2
    rh = rel_h.reshape(C2, ks)
    rw = rel_w.reshape(C2, ks)
    rel = jnp.concatenate(
        [jnp.broadcast_to(rh.T[:, None, :], (ks, ks, C2)),
         jnp.broadcast_to(rw.T[None, :, :], (ks, ks, C2))],
        axis=-1).reshape(ks * ks, C)

    kernel = functools.partial(_attention_conv_kernel, bh=bh, W=W, Wq=Wq, ks=ks,
                               pad=pad, C=C, lead=lead, cdt=cdt, mxu_bf16=mxu_bf16)
    out_nhwc = pl.pallas_call(
        kernel,
        out_shape=jax.ShapeDtypeStruct((B, H, W, C), x.dtype),
        grid_spec=pltpu.PrefetchScalarGridSpec(
            num_scalar_prefetch=0,
            grid=(B, n_blocks),
            in_specs=[
                # TODO(synk): bump to pipeline_mode=pl.Buffered(3) if profiling
                # shows the halo-row DMA still exposed at step boundaries.
                pl.BlockSpec((1, 1, R_in, Cin), lambda b, i: (b, i, 0, 0)),
                pl.BlockSpec((Cin, 3 * C), lambda b, i: (0, 0)),      # resident weights
                pl.BlockSpec((ks * ks, C), lambda b, i: (0, 0)),      # resident rel table
            ],
            out_specs=pl.BlockSpec((1, bh, W, C), lambda b, i: (b, i, 0, 0)),
        ),
        compiler_params=pltpu.CompilerParams(
            dimension_semantics=("parallel", "parallel")),
    )(xb, wqkv, rel)

    # TODO(synk): keep the result channels-last if the consumer allows; the NCHW
    # contract of the original module forces this extra HBM round trip.
    return jnp.transpose(out_nhwc, (0, 3, 1, 2))


def _reference_attention_conv(x, wq, wk, wv, rel_h, rel_w, ks, pad):
    """Literal pure-JAX transcription of the PyTorch forward (for checking)."""
    B, Cin, H, W = x.shape
    C = wq.shape[1]
    hi = jax.lax.Precision.HIGHEST
    xpad = jnp.pad(x, ((0, 0), (0, 0), (pad, pad), (pad, pad)))
    q = jnp.einsum('bchw,cd->bdhw', x, wq, precision=hi)
    k = jnp.einsum('bchw,cd->bdhw', xpad, wk, precision=hi)
    v = jnp.einsum('bchw,cd->bdhw', xpad, wv, precision=hi)
    k_win = jnp.stack([jnp.stack([k[:, :, di:di + H, dj:dj + W] for dj in range(ks)],
                                 axis=-1) for di in range(ks)], axis=-2)   # (B,C,H,W,ks,ks)
    v_win = jnp.stack([jnp.stack([v[:, :, di:di + H, dj:dj + W] for dj in range(ks)],
                                 axis=-1) for di in range(ks)], axis=-2)
    C2 = C // 2
    rh = rel_h.reshape(C2, ks)
    rw = rel_w.reshape(C2, ks)
    k_win = jnp.concatenate(
        [k_win[:, :C2] + rh[None, :, None, None, :, None],
         k_win[:, C2:] + rw[None, :, None, None, None, :]], axis=1)
    logits = (q[..., None, None] * k_win).reshape(B, C, H, W, ks * ks)
    attn = jax.nn.softmax(logits, axis=-1)
    return jnp.sum(attn * v_win.reshape(B, C, H, W, ks * ks), axis=-1)


if __name__ == "__main__":
    key = jax.random.PRNGKey(0)
    B, Cin, H, W = 2, 4, 16, 16
    Cout, ks, pad, groups = 128, 3, 1, 4     # Cout=128 keeps every store lane-dense

    k0, k1, k2, k3, k4, k5 = jax.random.split(key, 6)
    std = (2.0 / Cout) ** 0.5                # kaiming_normal_, mode='fan_out'
    wq = std * jax.random.normal(k0, (Cin, Cout), jnp.float32)
    wk = std * jax.random.normal(k1, (Cin, Cout), jnp.float32)
    wv = std * jax.random.normal(k2, (Cin, Cout), jnp.float32)
    rel_h = jax.random.normal(k3, (Cout // 2, 1, 1, ks, 1), jnp.float32)
    rel_w = jax.random.normal(k4, (Cout // 2, 1, 1, 1, ks), jnp.float32)
    x = jax.random.normal(k5, (B, Cin, H, W), jnp.float32)

    cdt = _default_compute_dtype()           # bf16 on v6e/v7x, f32 otherwise
    fwd = jax.jit(functools.partial(attention_conv_forward, kernel_size=ks,
                                    stride=1, padding=pad, groups=groups,
                                    compute_dtype=cdt))
    out = jax.block_until_ready(fwd(x, wq, wk, wv, rel_h, rel_w))

    assert out.shape == (B, Cout, H, W)
    assert bool(jnp.all(jnp.isfinite(out)))

    ref = _reference_attention_conv(x, wq, wk, wv, rel_h, rel_w, ks, pad)
    tol = 2e-2 if jnp.dtype(cdt) == jnp.dtype(jnp.float32) else 6e-2
    max_err = float(jnp.max(jnp.abs(out - ref)))
    assert max_err < tol, f"mismatch vs reference: max abs err {max_err}"
    print("KERNEL_OK")
</pallas_src>

<mosaic_0001>
module attributes {stable_mosaic.version = 11 : i64} {
  func.func @_attention_conv_kernel(%arg0: i32, %arg1: i32, %arg2: memref<1x1x256x4xf32, #tpu.memory_space<vmem>>, %arg3: memref<4x384xf32, #tpu.memory_space<vmem>>, %arg4: memref<9x128xf32, #tpu.memory_space<vmem>>, %arg5: memref<1x8x16x128xf32, #tpu.memory_space<vmem>>) attributes {dimension_semantics = [#tpu.dimension_semantics<parallel>, #tpu.dimension_semantics<parallel>], iteration_bounds = array<i64: 2, 2>, scalar_prefetch = 0 : i64, scratch_operands = 0 : i64, tpu.core_type = #tpu.core_type<tc>, window_params = [{transform_indices = @transform_0, window_bounds = array<i64: 1, 1, 256, 4>}, {pipeline_mode = #tpu.pipeline_mode<synchronous>, transform_indices = @transform_1, window_bounds = array<i64: 4, 384>}, {pipeline_mode = #tpu.pipeline_mode<synchronous>, transform_indices = @transform_2, window_bounds = array<i64: 9, 128>}, {transform_indices = @transform_3, window_bounds = array<i64: 1, 8, 16, 128>}]} {
    %c0 = arith.constant 0 : index
    %c0_0 = arith.constant 0 : index
    %c0_1 = arith.constant 0 : index
    %c0_2 = arith.constant 0 : index
    %0 = vector.load %arg2[%c0, %c0_0, %c0_1, %c0_2] : memref<1x1x256x4xf32, #tpu.memory_space<vmem>>, vector<1x1x256x4xf32>
    %1 = vector.shape_cast %0 : vector<1x1x256x4xf32> to vector<256x4xf32>
    %c0_3 = arith.constant 0 : index
    %c0_4 = arith.constant 0 : index
    %2 = vector.load %arg3[%c0_3, %c0_4] : memref<4x384xf32, #tpu.memory_space<vmem>>, vector<4x384xf32>
    %cst = arith.constant dense<0.000000e+00> : vector<256x384xf32>
    %3 = tpu.matmul %1, %2, %cst {dimension_numbers = #tpu.dot_dimension_numbers<[1], [0], [0], [1], [0, 0, 1, 1], [], []>} : vector<256x4xf32>, vector<4x384xf32>, vector<256x384xf32> -> vector<256x384xf32>
    %4 = vector.extract_strided_slice %3 {offsets = [32, 0], sizes = [192, 128], strides = [1, 1]} : vector<256x384xf32> to vector<192x128xf32>
    %c0_5 = arith.constant 0 : index
    %c0_6 = arith.constant 0 : index
    %5 = vector.load %arg4[%c0_5, %c0_6] : memref<9x128xf32, #tpu.memory_space<vmem>>, vector<9x128xf32>
    %6 = vector.extract_strided_slice %3 {offsets = [7, 128], sizes = [240, 128], strides = [1, 1]} : vector<256x384xf32> to vector<240x128xf32>
    %7 = vector.extract_strided_slice %3 {offsets = [8, 128], sizes = [240, 128], strides = [1, 1]} : vector<256x384xf32> to vector<240x128xf32>
    %8 = vector.extract_strided_slice %3 {offsets = [9, 128], sizes = [240, 128], strides = [1, 1]} : vector<256x384xf32> to vector<240x128xf32>
    %9 = vector.extract_strided_slice %3 {offsets = [7, 256], sizes = [240, 128], strides = [1, 1]} : vector<256x384xf32> to vector<240x128xf32>
    %10 = vector.extract_strided_slice %3 {offsets = [8, 256], sizes = [240, 128], strides = [1, 1]} : vector<256x384xf32> to vector<240x128xf32>
    %11 = vector.extract_strided_slice %3 {offsets = [9, 256], sizes = [240, 128], strides = [1, 1]} : vector<256x384xf32> to vector<240x128xf32>
    %12 = vector.extract_strided_slice %6 {offsets = [0, 0], sizes = [192, 128], strides = [1, 1]} : vector<240x128xf32> to vector<192x128xf32>
    %13 = vector.extract_strided_slice %5 {offsets = [0, 0], sizes = [1, 128], strides = [1, 1]} : vector<9x128xf32> to vector<1x128xf32>
    %14 = vector.broadcast %13 : vector<1x128xf32> to vector<192x128xf32>
    %15 = arith.addf %12, %14 : vector<192x128xf32>
    %16 = arith.mulf %4, %15 : vector<192x128xf32>
    %17 = vector.extract_strided_slice %7 {offsets = [0, 0], sizes = [192, 128], strides = [1, 1]} : vector<240x128xf32> to vector<192x128xf32>
    %18 = vector.extract_strided_slice %5 {offsets = [1, 0], sizes = [1, 128], strides = [1, 1]} : vector<9x128xf32> to vector<1x128xf32>
    %19 = vector.broadcast %18 : vector<1x128xf32> to vector<192x128xf32>
    %20 = arith.addf %17, %19 : vector<192x128xf32>
    %21 = arith.mulf %4, %20 : vector<192x128xf32>
    %22 = arith.maximumf %16, %21 : vector<192x128xf32>
    %23 = vector.extract_strided_slice %8 {offsets = [0, 0], sizes = [192, 128], strides = [1, 1]} : vector<240x128xf32> to vector<192x128xf32>
    %24 = vector.extract_strided_slice %5 {offsets = [2, 0], sizes = [1, 128], strides = [1, 1]} : vector<9x128xf32> to vector<1x128xf32>
    %25 = vector.broadcast %24 : vector<1x128xf32> to vector<192x128xf32>
    %26 = arith.addf %23, %25 : vector<192x128xf32>
    %27 = arith.mulf %4, %26 : vector<192x128xf32>
    %28 = arith.maximumf %22, %27 : vector<192x128xf32>
    %29 = vector.extract_strided_slice %6 {offsets = [24, 0], sizes = [192, 128], strides = [1, 1]} : vector<240x128xf32> to vector<192x128xf32>
    %30 = vector.extract_strided_slice %5 {offsets = [3, 0], sizes = [1, 128], strides = [1, 1]} : vector<9x128xf32> to vector<1x128xf32>
    %31 = vector.broadcast %30 : vector<1x128xf32> to vector<192x128xf32>
    %32 = arith.addf %29, %31 : vector<192x128xf32>
    %33 = arith.mulf %4, %32 : vector<192x128xf32>
    %34 = arith.maximumf %28, %33 : vector<192x128xf32>
    %35 = vector.extract_strided_slice %7 {offsets = [24, 0], sizes = [192, 128], strides = [1, 1]} : vector<240x128xf32> to vector<192x128xf32>
    %36 = vector.extract_strided_slice %5 {offsets = [4, 0], sizes = [1, 128], strides = [1, 1]} : vector<9x128xf32> to vector<1x128xf32>
    %37 = vector.broadcast %36 : vector<1x128xf32> to vector<192x128xf32>
    %38 = arith.addf %35, %37 : vector<192x128xf32>
    %39 = arith.mulf %4, %38 : vector<192x128xf32>
    %40 = arith.maximumf %34, %39 : vector<192x128xf32>
    %41 = vector.extract_strided_slice %8 {offsets = [24, 0], sizes = [192, 128], strides = [1, 1]} : vector<240x128xf32> to vector<192x128xf32>
    %42 = vector.extract_strided_slice %5 {offsets = [5, 0], sizes = [1, 128], strides = [1, 1]} : vector<9x128xf32> to vector<1x128xf32>
    %43 = vector.broadcast %42 : vector<1x128xf32> to vector<192x128xf32>
    %44 = arith.addf %41, %43 : vector<192x128xf32>
    %45 = arith.mulf %4, %44 : vector<192x128xf32>
    %46 = arith.maximumf %40, %45 : vector<192x128xf32>
    %47 = vector.extract_strided_slice %6 {offsets = [48, 0], sizes = [192, 128], strides = [1, 1]} : vector<240x128xf32> to vector<192x128xf32>
    %48 = vector.extract_strided_slice %5 {offsets = [6, 0], sizes = [1, 128], strides = [1, 1]} : vector<9x128xf32> to vector<1x128xf32>
    %49 = vector.broadcast %48 : vector<1x128xf32> to vector<192x128xf32>
    %50 = arith.addf %47, %49 : vector<192x128xf32>
    %51 = arith.mulf %4, %50 : vector<192x128xf32>
    %52 = arith.maximumf %46, %51 : vector<192x128xf32>
    %53 = vector.extract_strided_slice %7 {offsets = [48, 0], sizes = [192, 128], strides = [1, 1]} : vector<240x128xf32> to vector<192x128xf32>
    %54 = vector.extract_strided_slice %5 {offsets = [7, 0], sizes = [1, 128], strides = [1, 1]} : vector<9x128xf32> to vector<1x128xf32>
    %55 = vector.broadcast %54 : vector<1x128xf32> to vector<192x128xf32>
    %56 = arith.addf %53, %55 : vector<192x128xf32>
    %57 = arith.mulf %4, %56 : vector<192x128xf32>
    %58 = arith.maximumf %52, %57 : vector<192x128xf32>
    %59 = vector.extract_strided_slice %8 {offsets = [48, 0], sizes = [192, 128], strides = [1, 1]} : vector<240x128xf32> to vector<192x128xf32>
    %60 = vector.extract_strided_slice %5 {offsets = [8, 0], sizes = [1, 128], strides = [1, 1]} : vector<9x128xf32> to vector<1x128xf32>
    %61 = vector.broadcast %60 : vector<1x128xf32> to vector<192x128xf32>
    %62 = arith.addf %59, %61 : vector<192x128xf32>
    %63 = arith.mulf %4, %62 : vector<192x128xf32>
    %64 = arith.maximumf %58, %63 : vector<192x128xf32>
    %65 = vector.extract_strided_slice %6 {offsets = [0, 0], sizes = [192, 128], strides = [1, 1]} : vector<240x128xf32> to vector<192x128xf32>
    %66 = vector.extract_strided_slice %5 {offsets = [0, 0], sizes = [1, 128], strides = [1, 1]} : vector<9x128xf32> to vector<1x128xf32>
    %67 = vector.broadcast %66 : vector<1x128xf32> to vector<192x128xf32>
    %68 = arith.addf %65, %67 : vector<192x128xf32>
    %69 = arith.mulf %4, %68 : vector<192x128xf32>
    %70 = arith.subf %69, %64 : vector<192x128xf32>
    %71 = math.exp %70 : vector<192x128xf32>
    %72 = vector.extract_strided_slice %9 {offsets = [0, 0], sizes = [192, 128], strides = [1, 1]} : vector<240x128xf32> to vector<192x128xf32>
    %73 = arith.mulf %71, %72 : vector<192x128xf32>
    %74 = vector.extract_strided_slice %7 {offsets = [0, 0], sizes = [192, 128], strides = [1, 1]} : vector<240x128xf32> to vector<192x128xf32>
    %75 = vector.extract_strided_slice %5 {offsets = [1, 0], sizes = [1, 128], strides = [1, 1]} : vector<9x128xf32> to vector<1x128xf32>
    %76 = vector.broadcast %75 : vector<1x128xf32> to vector<192x128xf32>
    %77 = arith.addf %74, %76 : vector<192x128xf32>
    %78 = arith.mulf %4, %77 : vector<192x128xf32>
    %79 = arith.subf %78, %64 : vector<192x128xf32>
    %80 = math.exp %79 : vector<192x128xf32>
    %81 = vector.extract_strided_slice %10 {offsets = [0, 0], sizes = [192, 128], strides = [1, 1]} : vector<240x128xf32> to vector<192x128xf32>
    %82 = arith.mulf %80, %81 : vector<192x128xf32>
    %83 = arith.addf %71, %80 : vector<192x128xf32>
    %84 = arith.addf %73, %82 : vector<192x128xf32>
    %85 = vector.extract_strided_slice %8 {offsets = [0, 0], sizes = [192, 128], strides = [1, 1]} : vector<240x128xf32> to vector<192x128xf32>
    %86 = vector.extract_strided_slice %5 {offsets = [2, 0], sizes = [1, 128], strides = [1, 1]} : vector<9x128xf32> to vector<1x128xf32>
    %87 = vector.broadcast %86 : vector<1x128xf32> to vector<192x128xf32>
    %88 = arith.addf %85, %87 : vector<192x128xf32>
    %89 = arith.mulf %4, %88 : vector<192x128xf32>
    %90 = arith.subf %89, %64 : vector<192x128xf32>
    %91 = math.exp %90 : vector<192x128xf32>
    %92 = vector.extract_strided_slice %11 {offsets = [0, 0], sizes = [192, 128], strides = [1, 1]} : vector<240x128xf32> to vector<192x128xf32>
    %93 = arith.mulf %91, %92 : vector<192x128xf32>
    %94 = arith.addf %83, %91 : vector<192x128xf32>
    %95 = arith.addf %84, %93 : vector<192x128xf32>
    %96 = vector.extract_strided_slice %6 {offsets = [24, 0], sizes = [192, 128], strides = [1, 1]} : vector<240x128xf32> to vector<192x128xf32>
    %97 = vector.extract_strided_slice %5 {offsets = [3, 0], sizes = [1, 128], strides = [1, 1]} : vector<9x128xf32> to vector<1x128xf32>
    %98 = vector.broadcast %97 : vector<1x128xf32> to vector<192x128xf32>
    %99 = arith.addf %96, %98 : vector<192x128xf32>
    %100 = arith.mulf %4, %99 : vector<192x128xf32>
    %101 = arith.subf %100, %64 : vector<192x128xf32>
    %102 = math.exp %101 : vector<192x128xf32>
    %103 = vector.extract_strided_slice %9 {offsets = [24, 0], sizes = [192, 128], strides = [1, 1]} : vector<240x128xf32> to vector<192x128xf32>
    %104 = arith.mulf %102, %103 : vector<192x128xf32>
    %105 = arith.addf %94, %102 : vector<192x128xf32>
    %106 = arith.addf %95, %104 : vector<192x128xf32>
    %107 = vector.extract_strided_slice %7 {offsets = [24, 0], sizes = [192, 128], strides = [1, 1]} : vector<240x128xf32> to vector<192x128xf32>
    %108 = vector.extract_strided_slice %5 {offsets = [4, 0], sizes = [1, 128], strides = [1, 1]} : vector<9x128xf32> to vector<1x128xf32>
    %109 = vector.broadcast %108 : vector<1x128xf32> to vector<192x128xf32>
    %110 = arith.addf %107, %109 : vector<192x128xf32>
    %111 = arith.mulf %4, %110 : vector<192x128xf32>
    %112 = arith.subf %111, %64 : vector<192x128xf32>
    %113 = math.exp %112 : vector<192x128xf32>
    %114 = vector.extract_strided_slice %10 {offsets = [24, 0], sizes = [192, 128], strides = [1, 1]} : vector<240x128xf32> to vector<192x128xf32>
    %115 = arith.mulf %113, %114 : vector<192x128xf32>
    %116 = arith.addf %105, %113 : vector<192x128xf32>
    %117 = arith.addf %106, %115 : vector<192x128xf32>
    %118 = vector.extract_strided_slice %8 {offsets = [24, 0], sizes = [192, 128], strides = [1, 1]} : vector<240x128xf32> to vector<192x128xf32>
    %119 = vector.extract_strided_slice %5 {offsets = [5, 0], sizes = [1, 128], strides = [1, 1]} : vector<9x128xf32> to vector<1x128xf32>
    %120 = vector.broadcast %119 : vector<1x128xf32> to vector<192x128xf32>
    %121 = arith.addf %118, %120 : vector<192x128xf32>
    %122 = arith.mulf %4, %121 : vector<192x128xf32>
    %123 = arith.subf %122, %64 : vector<192x128xf32>
    %124 = math.exp %123 : vector<192x128xf32>
    %125 = vector.extract_strided_slice %11 {offsets = [24, 0], sizes = [192, 128], strides = [1, 1]} : vector<240x128xf32> to vector<192x128xf32>
    %126 = arith.mulf %124, %125 : vector<192x128xf32>
    %127 = arith.addf %116, %124 : vector<192x128xf32>
    %128 = arith.addf %117, %126 : vector<192x128xf32>
    %129 = vector.extract_strided_slice %6 {offsets = [48, 0], sizes = [192, 128], strides = [1, 1]} : vector<240x128xf32> to vector<192x128xf32>
    %130 = vector.extract_strided_slice %5 {offsets = [6, 0], sizes = [1, 128], strides = [1, 1]} : vector<9x128xf32> to vector<1x128xf32>
    %131 = vector.broadcast %130 : vector<1x128xf32> to vector<192x128xf32>
    %132 = arith.addf %129, %131 : vector<192x128xf32>
    %133 = arith.mulf %4, %132 : vector<192x128xf32>
    %134 = arith.subf %133, %64 : vector<192x128xf32>
    %135 = math.exp %134 : vector<192x128xf32>
    %136 = vector.extract_strided_slice %9 {offsets = [48, 0], sizes = [192, 128], strides = [1, 1]} : vector<240x128xf32> to vector<192x128xf32>
    %137 = arith.mulf %135, %136 : vector<192x128xf32>
    %138 = arith.addf %127, %135 : vector<192x128xf32>
    %139 = arith.addf %128, %137 : vector<192x128xf32>
    %140 = vector.extract_strided_slice %7 {offsets = [48, 0], sizes = [192, 128], strides = [1, 1]} : vector<240x128xf32> to vector<192x128xf32>
    %141 = vector.extract_strided_slice %5 {offsets = [7, 0], sizes = [1, 128], strides = [1, 1]} : vector<9x128xf32> to vector<1x128xf32>
    %142 = vector.broadcast %141 : vector<1x128xf32> to vector<192x128xf32>
    %143 = arith.addf %140, %142 : vector<192x128xf32>
    %144 = arith.mulf %4, %143 : vector<192x128xf32>
    %145 = arith.subf %144, %64 : vector<192x128xf32>
    %146 = math.exp %145 : vector<192x128xf32>
    %147 = vector.extract_strided_slice %10 {offsets = [48, 0], sizes = [192, 128], strides = [1, 1]} : vector<240x128xf32> to vector<192x128xf32>
    %148 = arith.mulf %146, %147 : vector<192x128xf32>
    %149 = arith.addf %138, %146 : vector<192x128xf32>
    %150 = arith.addf %139, %148 : vector<192x128xf32>
    %151 = vector.extract_strided_slice %8 {offsets = [48, 0], sizes = [192, 128], strides = [1, 1]} : vector<240x128xf32> to vector<192x128xf32>
    %152 = vector.extract_strided_slice %5 {offsets = [8, 0], sizes = [1, 128], strides = [1, 1]} : vector<9x128xf32> to vector<1x128xf32>
    %153 = vector.broadcast %152 : vector<1x128xf32> to vector<192x128xf32>
    %154 = arith.addf %151, %153 : vector<192x128xf32>
    %155 = arith.mulf %4, %154 : vector<192x128xf32>
    %156 = arith.subf %155, %64 : vector<192x128xf32>
    %157 = math.exp %156 : vector<192x128xf32>
    %158 = vector.extract_strided_slice %11 {offsets = [48, 0], sizes = [192, 128], strides = [1, 1]} : vector<240x128xf32> to vector<192x128xf32>
    %159 = arith.mulf %157, %158 : vector<192x128xf32>
    %160 = arith.addf %149, %157 : vector<192x128xf32>
    %161 = arith.addf %150, %159 : vector<192x128xf32>
    %162 = vector.shape_cast %161 : vector<192x128xf32> to vector<8x24x128xf32>
    %163 = vector.extract_strided_slice %162 {offsets = [0, 0, 0], sizes = [8, 16, 128], strides = [1, 1, 1]} : vector<8x24x128xf32> to vector<8x16x128xf32>
    %164 = vector.shape_cast %160 : vector<192x128xf32> to vector<8x24x128xf32>
    %165 = vector.extract_strided_slice %164 {offsets = [0, 0, 0], sizes = [8, 16, 128], strides = [1, 1, 1]} : vector<8x24x128xf32> to vector<8x16x128xf32>
    %166 = tpu.reciprocal %165 {approx = true} : vector<8x16x128xf32> -> vector<8x16x128xf32>
    %167 = arith.mulf %163, %166 : vector<8x16x128xf32>
    %c0_7 = arith.constant 0 : index
    %c0_8 = arith.constant 0 : index
    %c0_9 = arith.constant 0 : index
    %c0_10 = arith.constant 0 : index
    %168 = vector.load %arg5[%c0_7, %c0_8, %c0_9, %c0_10] : memref<1x8x16x128xf32, #tpu.memory_space<vmem>>, vector<1x8x16x128xf32>
    %169 = vector.shape_cast %168 : vector<1x8x16x128xf32> to vector<8x16x128xf32>
    %170 = vector.shape_cast %167 : vector<8x16x128xf32> to vector<1x8x16x128xf32>
    tpu.vector_store %arg5[%c0_7, %c0_8, %c0_9, %c0_10], %170 {strides = array<i32>} : memref<1x8x16x128xf32, #tpu.memory_space<vmem>>, vector<1x8x16x128xf32>,
    return
  }
  func.func @transform_0(%arg0: i32, %arg1: i32) -> (i32, i32, i32, i32) {
    %c0_i32 = arith.constant 0 : i32
    %c0_i32_0 = arith.constant 0 : i32
    %c0_i32_1 = arith.constant 0 : i32
    return %arg0, %arg1, %c0_i32, %c0_i32_0 : i32, i32, i32, i32
  }
  func.func @transform_1(%arg0: i32, %arg1: i32) -> (i32, i32) {
    %c0_i32 = arith.constant 0 : i32
    %c0_i32_0 = arith.constant 0 : i32
    %c0_i32_1 = arith.constant 0 : i32
    return %c0_i32, %c0_i32_0 : i32, i32
  }
  func.func @transform_2(%arg0: i32, %arg1: i32) -> (i32, i32) {
    %c0_i32 = arith.constant 0 : i32
    %c0_i32_0 = arith.constant 0 : i32
    %c0_i32_1 = arith.constant 0 : i32
    return %c0_i32, %c0_i32_0 : i32, i32
  }
  func.func @transform_3(%arg0: i32, %arg1: i32) -> (i32, i32, i32, i32) {
    %c0_i32 = arith.constant 0 : i32
    %c0_i32_0 = arith.constant 0 : i32
    %c0_i32_1 = arith.constant 0 : i32
    return %arg0, %arg1, %c0_i32, %c0_i32_0 : i32, i32, i32, i32
  }
}

</mosaic_0001>

<llo_original>
// kernel: attention_conv_forward.1
$region0: #{attention_conv_forward.1}
  #allocation0 [shape = 'u32[]', space=smem, size = 0x4, offset = 0x4, fixed_abs, tag = 'smem constant byte address 0x4 - core index']
  #allocation1 [shape = 'u32[72,128]{1,0:T(1,128)}', space=vmem, size = 0x9000, scoped, tag = 'internal scratch']
  %s0 = inlined_call_operand.vmem [shape: f32[2,2,256,4], index: 0, kind: input, shape index: {}]
  %s1 = inlined_call_operand.vmem [shape: f32[4,384], index: 1, kind: input, shape index: {}]
  %s2 = inlined_call_operand.vmem [shape: f32[9,128], index: 2, kind: input, shape index: {}]
  %s3 = inlined_call_operand.hbm [shape: f32[2,16,16,128], index: 3, kind: output, shape index: {}]
  %s4 = sld [smem:[#allocation0]]
  $region45: #{attention_conv_forward.1} parent=0
    _
  %s6 = ssub.s32 1, %s4
  %s7 = scalar_select 0, %s6, %s4
  $region1: #{attention_conv_forward.1} parent=0
    #allocation2 [shape = 'u8[131072]{0}', space=vmem, size = 0x20000, scoped, tag = 'output window, operand 0']
    #allocation3 [shape = 's32[2]{0}', space=sflag, size = 0x8, scoped, tag = 'scoped memory for attention_conv_forward.1']
    %8 = vsyncpa [#allocation3], 0
    %s9 = scalar_lea.sflag [#allocation3], 1
    %10 = vsyncpa %s9, 0
    loop: start=0, step=1, limit=6
    $region2: #{attention_conv_forward.1} parent=1 // loop_pre_header
      _
    $region3: #{attention_conv_forward.1} parent=1 // loop_header
      %s12 = sphi 0, %s16
      %p13 = scmp.ge.s32.totalorder %s12, 6
      %s19 = sphi 0, %s31
      %s20 = sphi 0, %s27
      %s21 = sphi 0, %s19
      %s22 = sphi 0, %s20
      %s23 = sphi 0, %s21
      %s24 = sphi 0, %s22
      %s36 = sphi 0, %s38
      %s39 = sphi 0, %s36
      %s40 = sphi 0, %s39
      %s56 = sphi 0, %s40
      %s60 = sphi 0, %s60
      %s62 = sphi 0, %s60
      %s63 = sphi 0, %s62
      %s77 = sphi 0, %s63
      %s81 = sphi 0, %s81
      %s83 = sphi 0, %s81
      %s84 = sphi 0, %s83
      %s98 = sphi 0, %s84
      %s106 = sphi 0, %s108
      %s109 = sphi 0, %s106
      %s110 = sphi 0, %s109
      %s126 = sphi 0, %s110
    $region4: #{attention_conv_forward.1} parent=1 // loop_header_branch
      %15 = sbr.rel (%p13) target = $region8
    $region5: #{attention_conv_forward.1} parent=1 // loop_body
      %s17 = ssub.s32 %s12, 1
      %s18 = ssub.s32 %s12, 2
      %s25 = sadd.s32 1, %s20
      %p26 = scmp.ge.s32.totalorder %s25, 2
      %s27 = scalar_select %p26, 0, %s25
      %s28 = sadd.s32 1, %s19
      %s29 = scalar_select %p26, %s28, %s19
      %p30 = scmp.ge.s32.totalorder %s29, 2
      %s31 = scalar_select %p30, 0, %s29
      %s32 = ssub.s32 %s19, %s31
      %s33 = ssub.s32 %s20, %s27
      %s34 = sor.u32 %s32, %s33
      %p35 = scmp.eq.s32.totalorder %s34, 0
      %s37 = sadd.s32 %s36, 1
      %s38 = scalar_select %p35, %s36, %s37
      %p41 = pneg %p35
      %p42 = scmp.eq.s32.totalorder %s12, 3
      %p43 = por %p41, %p42
      %p44 = scmp.ne.s32.totalorder %s36, %s39
      %p45 = scmp.eq.s32.totalorder %s12, 0
      %p46 = por %p44, %p45
      %p47 = scmp.ne.s32.totalorder %s36, %s39
      %p48 = scmp.eq.s32.totalorder %s17, 3
      %p49 = por %p47, %p48
      %p50 = scmp.ne.s32.totalorder %s39, %s40
      %p51 = scmp.eq.s32.totalorder %s17, 0
      %p52 = por %p50, %p51
      %p53 = scmp.ne.s32.totalorder %s39, %s40
      %p54 = scmp.eq.s32.totalorder %s18, 3
      %p55 = por %p53, %p54
      %p57 = scmp.ne.s32.totalorder %s40, %s56
      %p58 = scmp.eq.s32.totalorder %s18, 0
      %p59 = por %p57, %p58
      %s61 = sadd.s32 %s60, 1
      %p64 = scmp.eq.s32.totalorder %s12, 3
      %p65 = scmp.ne.s32.totalorder %s60, %s62
      %p66 = scmp.eq.s32.totalorder %s12, 0
      %p67 = por %p65, %p66
      %p68 = scmp.ne.s32.totalorder %s60, %s62
      %p69 = scmp.eq.s32.totalorder %s17, 3
      %p70 = por %p68, %p69
      %p71 = scmp.ne.s32.totalorder %s62, %s63
      %p72 = scmp.eq.s32.totalorder %s17, 0
      %p73 = por %p71, %p72
      %p74 = scmp.ne.s32.totalorder %s62, %s63
      %p75 = scmp.eq.s32.totalorder %s18, 3
      %p76 = por %p74, %p75
      %p78 = scmp.ne.s32.totalorder %s63, %s77
      %p79 = scmp.eq.s32.totalorder %s18, 0
      %p80 = por %p78, %p79
      %s82 = sadd.s32 %s81, 1
      %p85 = scmp.eq.s32.totalorder %s12, 3
      %p86 = scmp.ne.s32.totalorder %s81, %s83
      %p87 = scmp.eq.s32.totalorder %s12, 0
      %p88 = por %p86, %p87
      %p89 = scmp.ne.s32.totalorder %s81, %s83
      %p90 = scmp.eq.s32.totalorder %s17, 3
      %p91 = por %p89, %p90
      %p92 = scmp.ne.s32.totalorder %s83, %s84
      %p93 = scmp.eq.s32.totalorder %s17, 0
      %p94 = por %p92, %p93
      %p95 = scmp.ne.s32.totalorder %s83, %s84
      %p96 = scmp.eq.s32.totalorder %s18, 3
      %p97 = por %p95, %p96
      %p99 = scmp.ne.s32.totalorder %s84, %s98
      %p100 = scmp.eq.s32.totalorder %s18, 0
      %p101 = por %p99, %p100
      %s102 = ssub.s32 %s19, %s31
      %s103 = ssub.s32 %s20, %s27
      %s104 = sor.u32 %s102, %s103
      %p105 = scmp.eq.s32.totalorder %s104, 0
      %s107 = sadd.s32 %s106, 1
      %s108 = scalar_select %p105, %s106, %s107
      %p111 = pneg %p105
      %p112 = scmp.eq.s32.totalorder %s12, 3
      %p113 = por %p111, %p112
      %p114 = scmp.ne.s32.totalorder %s106, %s109
      %p115 = scmp.eq.s32.totalorder %s12, 0
      %p116 = por %p114, %p115
      %p117 = scmp.ne.s32.totalorder %s106, %s109
      %p118 = scmp.eq.s32.totalorder %s17, 3
      %p119 = por %p117, %p118
      %p120 = scmp.ne.s32.totalorder %s109, %s110
      %p121 = scmp.eq.s32.totalorder %s17, 0
      %p122 = por %p120, %p121
      %p123 = scmp.ne.s32.totalorder %s109, %s110
      %p124 = scmp.eq.s32.totalorder %s18, 3
      %p125 = por %p123, %p124
      %p127 = scmp.ne.s32.totalorder %s110, %s126
      %p128 = scmp.eq.s32.totalorder %s18, 0
      %p129 = por %p127, %p128
      %p130 = scmp.le.s32.totalorder 1, %s12
      %p131 = scmp.lt.s32.totalorder %s12, 5
      %p132 = pnand %p130, %p131
      %p133 = pneg %p132
      // Predicated region
      $region9: #{attention_conv_forward.1} parent=5 // pred_check
        _
      $region10: #{attention_conv_forward.1} parent=5 // pred_check_branch
        %135 = sbr.rel (%p132) target = $region12
      $region11: #{attention_conv_forward.1} parent=5 // pred_region
        %s136 = ssub.s32 %s12, 1
        // Predicated region
        $region13: #{attention_conv_forward.1} parent=11 // pred_check
          %p137 = pneg %p73
        $region14: #{attention_conv_forward.1} parent=11 // pred_check_branch
          %139 = sbr.rel (%p137) target = $region16
        $region15: #{attention_conv_forward.1} parent=11 // pred_region
          _
        $region16: #{attention_conv_forward.1} parent=11 // pred_fallthru
          _
        // Predicated region
        $region17: #{attention_conv_forward.1} parent=11 // pred_check
          %p140 = pneg %p94
        $region18: #{attention_conv_forward.1} parent=11 // pred_check_branch
          %142 = sbr.rel (%p140) target = $region20
        $region19: #{attention_conv_forward.1} parent=11 // pred_region
          _
        $region20: #{attention_conv_forward.1} parent=11 // pred_fallthru
          _
      $region12: #{attention_conv_forward.1} parent=5 // pred_fallthru
        _
      %p143 = scmp.lt.s32.totalorder %s12, 4
      // Predicated region
      $region21: #{attention_conv_forward.1} parent=5 // pred_check
        %p144 = pneg %p143
      $region22: #{attention_conv_forward.1} parent=5 // pred_check_branch
        %146 = sbr.rel (%p144) target = $region24
      $region23: #{attention_conv_forward.1} parent=5 // pred_region
        // Predicated region
        $region25: #{attention_conv_forward.1} parent=23 // pred_check
          %p147 = pneg %p46
        $region26: #{attention_conv_forward.1} parent=23 // pred_check_branch
          %149 = sbr.rel (%p147) target = $region28
        $region27: #{attention_conv_forward.1} parent=23 // pred_region
          %p150 = scmp.lt.s32.totalorder %s19, 1
          %s151 = scalar_select %p150, %s19, 1
          %p152 = scmp.lt.s32.totalorder %s20, 1
          %s153 = scalar_select %p152, %s20, 1
          %s154 = smul.addr %s153, 32
          %s155 = smul.addr %s151, 64
          %s156 = sadd.s32 %s154, %s155
          %s157 = smul.addr %s156, 8
          %s158 = scalar_lea.vmem %s0, %s157
        $region28: #{attention_conv_forward.1} parent=23 // pred_fallthru
          _
      $region24: #{attention_conv_forward.1} parent=5 // pred_fallthru
        _
      %p159 = scmp.le.s32.totalorder 1, %s12
      %p160 = scmp.lt.s32.totalorder %s12, 5
      %p161 = pnand %p159, %p160
      %p162 = pneg %p161
      // Predicated region
      $region29: #{attention_conv_forward.1} parent=5 // pred_check
        _
      $region30: #{attention_conv_forward.1} parent=5 // pred_check_branch
        %164 = sbr.rel (%p161) target = $region32
      $region31: #{attention_conv_forward.1} parent=5 // pred_region
        %s165 = ssub.s32 %s12, 1
        %p166 = scmp.lt.s32.totalorder %s21, 1
        %s167 = scalar_select %p166, %s21, 1
        %p168 = scmp.lt.s32.totalorder %s22, 1
        %s169 = scalar_select %p168, %s22, 1
        %s170 = smul.addr %s169, 32
        %s171 = smul.addr %s167, 64
        %s172 = sadd.s32 %s170, %s171
        %s173 = smul.addr %s172, 8
        %s174 = scalar_lea.vmem %s0, %s173
        %p175 = pneg %p52
        %p176 = pneg %p49
        %p177 = pneg %p73
        %p178 = pneg %p70
        %p179 = pneg %p94
        %p180 = pneg %p91
        %p181 = pneg %p122
        %p182 = pneg %p119
        %s183 = sand.u32 %s109, 1
        %s184 = scalar_lea.sflag [#allocation3], %s183
        %s185 = sand.u32 %s109, 1
        %s186 = smul.addr %s185, 128
        %s187 = scalar_lea.vmem [#allocation2], %s186
        %p188 = scmp.lt.s32.totalorder %s21, 1
        %s189 = scalar_select %p188, %s21, 1
        %p190 = scmp.lt.s32.totalorder %s22, 1
        %s191 = scalar_select %p190, %s22, 1
        %s192 = smul.addr %s191, 32
        %s193 = smul.addr %s189, 64
        %s194 = sadd.s32 %s192, %s193
        %s195 = smul.addr %s194, 8
        %s196 = scalar_lea.vmem %s0, %s195
        %s197 = smul.u32 8, %s22
        %v198 = vld [vmem:[%s196] sm:$0xff]
        %v199 = vld [vmem:[%s196 + $0x8] sm:$0xff]
        %v200 = vld [vmem:[%s196 + $0x10] sm:$0xff]
        %v201 = vld [vmem:[%s196 + $0x18] sm:$0xff]
        %v202 = vld [vmem:[%s196 + $0x20] sm:$0xff]
        %v203 = vld [vmem:[%s196 + $0x28] sm:$0xff]
        %v204 = vld [vmem:[%s196 + $0x30] sm:$0xff]
        %v205 = vld [vmem:[%s196 + $0x38] sm:$0xff]
        %v206 = vld [vmem:[%s196 + $0x40] sm:$0xff]
        %v207 = vld [vmem:[%s196 + $0x48] sm:$0xff]
        %v208 = vld [vmem:[%s196 + $0x50] sm:$0xff]
        %v209 = vld [vmem:[%s196 + $0x58] sm:$0xff]
        %v210 = vld [vmem:[%s196 + $0x60] sm:$0xff]
        %v211 = vld [vmem:[%s196 + $0x68] sm:$0xff]
        %v212 = vld [vmem:[%s196 + $0x70] sm:$0xff]
        %v213 = vld [vmem:[%s196 + $0x78] sm:$0xff]
        %v214 = vld [vmem:[%s196 + $0x80] sm:$0xff]
        %v215 = vld [vmem:[%s196 + $0x88] sm:$0xff]
        %v216 = vld [vmem:[%s196 + $0x90] sm:$0xff]
        %v217 = vld [vmem:[%s196 + $0x98] sm:$0xff]
        %v218 = vld [vmem:[%s196 + $0xa0] sm:$0xff]
        %v219 = vld [vmem:[%s196 + $0xa8] sm:$0xff]
        %v220 = vld [vmem:[%s196 + $0xb0] sm:$0xff]
        %v221 = vld [vmem:[%s196 + $0xb8] sm:$0xff]
        %v222 = vld [vmem:[%s196 + $0xc0] sm:$0xff]
        %v223 = vld [vmem:[%s196 + $0xc8] sm:$0xff]
        %v224 = vld [vmem:[%s196 + $0xd0] sm:$0xff]
        %v225 = vld [vmem:[%s196 + $0xd8] sm:$0xff]
        %v226 = vld [vmem:[%s196 + $0xe0] sm:$0xff]
        %v227 = vld [vmem:[%s196 + $0xe8] sm:$0xff]
        %v228 = vld [vmem:[%s196 + $0xf0] sm:$0xff]
        %v229 = vld [vmem:[%s196 + $0xf8] sm:$0xff]
        %v230 = vld [vmem:[%s1] sm:$0xff]
        %v231 = vld [vmem:[%s1 + $0x8] sm:$0xf]
        %234 = vst [vmem:[#allocation1] ss:$2 sm:$0xff] %v230
        %s235 = scalar_lea.vmem [#allocation1], 16
        %236 = vst [vmem:[%s235] ss:$2 sm:$0xff] %v231
        %v237 = vld.sshfl [vmem:[#allocation1] sm:$0xff pattern:$0x75316420]
        %v238 = vld.sshfl [vmem:[#allocation1 + $0x8] sm:$0xff pattern:$0x75316420]
        %v239 = vld.sshfl [vmem:[#allocation1 + $0x10] sm:$0xff pattern:$0x75316420]
        %vm240 = vcmask 31744
        %v242 = vsel %vm240, %v198, 0
        %v245 = vsel %vm240, %v199, 0
        %v248 = vsel %vm240, %v200, 0
        %v251 = vsel %vm240, %v201, 0
        %v254 = vsel %vm240, %v202, 0
        %v257 = vsel %vm240, %v203, 0
        %v260 = vsel %vm240, %v204, 0
        %v263 = vsel %vm240, %v205, 0
        %v266 = vsel %vm240, %v206, 0
        %v269 = vsel %vm240, %v207, 0
        %v272 = vsel %vm240, %v208, 0
        %v275 = vsel %vm240, %v209, 0
        %v278 = vsel %vm240, %v210, 0
        %v281 = vsel %vm240, %v211, 0
        %v284 = vsel %vm240, %v212, 0
        %v287 = vsel %vm240, %v213, 0
        %v290 = vsel %vm240, %v214, 0
        %v293 = vsel %vm240, %v215, 0
        %v296 = vsel %vm240, %v216, 0
        %v299 = vsel %vm240, %v217, 0
        %v302 = vsel %vm240, %v218, 0
        %v305 = vsel %vm240, %v219, 0
        %v308 = vsel %vm240, %v220, 0
        %v311 = vsel %vm240, %v221, 0
        %v314 = vsel %vm240, %v222, 0
        %v317 = vsel %vm240, %v223, 0
        %v320 = vsel %vm240, %v224, 0
        %v323 = vsel %vm240, %v225, 0
        %v326 = vsel %vm240, %v226, 0
        %v329 = vsel %vm240, %v227, 0
        %v332 = vsel %vm240, %v228, 0
        %v335 = vsel %vm240, %v229, 0
        %vm337 = vcmask 1043456
        %v338 = vsel %vm337, %v237, 0
        %v340 = vsel %vm337, %v238, 0
        %v342 = vsel %vm337, %v239, 0
        %344 = vmatpush.msra.mxu0 0.0
        %345 = vmatpush.msra.mxu0 0.0
        %346 = vmatpush.msra.mxu0 0.0
        %347 = vmatpush.msra.mxu0 0.0
        %348 = vmatpush.msra.mxu0 0.0
        %349 = vmatpush.msra.mxu0 0.0
        %350 = vmatpush.msra.mxu0 0.0
        %351 = vmatpush.msra.mxu0 0.0
        %352 = vmatpush.msra.mxu0 0.0
        %353 = vmatpush.msra.mxu0 0.0
        %354 = vmatpush.msra.mxu0 0.0
        %355 = vmatpush.msra.mxu0 0.0
        %356 = vmatpush.msra.mxu0 0.0
        %357 = vmatpush.msra.mxu0 0.0
        %358 = vmatpush.msra.mxu0 0.0
        %359 = vmatpush.msra.mxu0 %v338
        %360 = vmatmul.f32.gmra.mxu0 %v242
        %v361 = vpop.f32.mrf.mxu0
        %362 = vmatmul.f32.gmra.mxu0 %v245
        %v363 = vpop.f32.mrf.mxu0
        %364 = vmatmul.f32.gmra.mxu0 %v248
        %v365 = vpop.f32.mrf.mxu0
        %366 = vmatmul.f32.gmra.mxu0 %v251
        %v367 = vpop.f32.mrf.mxu0
        %368 = vmatmul.f32.gmra.mxu0 %v254
        %v369 = vpop.f32.mrf.mxu0
        %v370 = vadd.f32 0.0, %v369
        %371 = vmatmul.f32.gmra.mxu0 %v257
        %v372 = vpop.f32.mrf.mxu0
        %v373 = vadd.f32 0.0, %v372
        %374 = vmatmul.f32.gmra.mxu0 %v260
        %v375 = vpop.f32.mrf.mxu0
        %376 = vmatmul.f32.gmra.mxu0 %v263
        %v377 = vpop.f32.mrf.mxu0
        %v378 = vadd.f32 0.0, %v377
        %379 = vmatmul.f32.gmra.mxu0 %v266
        %v380 = vpop.f32.mrf.mxu0
        %v381 = vadd.f32 0.0, %v380
        %382 = vmatmul.f32.gmra.mxu0 %v269
        %v383 = vpop.f32.mrf.mxu0
        %384 = vmatmul.f32.gmra.mxu0 %v272
        %v385 = vpop.f32.mrf.mxu0
        %v386 = vadd.f32 0.0, %v385
        %387 = vmatmul.f32.gmra.mxu0 %v275
        %v388 = vpop.f32.mrf.mxu0
        %v389 = vadd.f32 0.0, %v388
        %390 = vmatmul.f32.gmra.mxu0 %v278
        %v391 = vpop.f32.mrf.mxu0
        %392 = vmatmul.f32.gmra.mxu0 %v281
        %v393 = vpop.f32.mrf.mxu0
        %v394 = vadd.f32 0.0, %v393
        %395 = vmatmul.f32.gmra.mxu0 %v284
        %v396 = vpop.f32.mrf.mxu0
        %v397 = vadd.f32 0.0, %v396
        %398 = vmatmul.f32.gmra.mxu0 %v287
        %v399 = vpop.f32.mrf.mxu0
        %400 = vmatmul.f32.gmra.mxu0 %v290
        %v401 = vpop.f32.mrf.mxu0
        %v402 = vadd.f32 0.0, %v401
        %403 = vmatmul.f32.gmra.mxu0 %v293
        %v404 = vpop.f32.mrf.mxu0
        %v405 = vadd.f32 0.0, %v404
        %406 = vmatmul.f32.gmra.mxu0 %v296
        %v407 = vpop.f32.mrf.mxu0
        %408 = vmatmul.f32.gmra.mxu0 %v299
        %v409 = vpop.f32.mrf.mxu0
        %v410 = vadd.f32 0.0, %v409
        %411 = vmatmul.f32.gmra.mxu0 %v302
        %v412 = vpop.f32.mrf.mxu0
        %v413 = vadd.f32 0.0, %v412
        %414 = vmatmul.f32.gmra.mxu0 %v305
        %v415 = vpop.f32.mrf.mxu0
        %416 = vmatmul.f32.gmra.mxu0 %v308
        %v417 = vpop.f32.mrf.mxu0
        %v418 = vadd.f32 0.0, %v417
        %419 = vmatmul.f32.gmra.mxu0 %v311
        %v420 = vpop.f32.mrf.mxu0
        %v421 = vadd.f32 0.0, %v420
        %422 = vmatmul.f32.gmra.mxu0 %v314
        %v423 = vpop.f32.mrf.mxu0
        %424 = vmatmul.f32.gmra.mxu0 %v317
        %v425 = vpop.f32.mrf.mxu0
        %v426 = vadd.f32 0.0, %v425
        %427 = vmatmul.f32.gmra.mxu0 %v320
        %v428 = vpop.f32.mrf.mxu0
        %v429 = vadd.f32 0.0, %v428
        %430 = vmatmul.f32.gmra.mxu0 %v323
        %v431 = vpop.f32.mrf.mxu0
        %432 = vmatmul.f32.gmra.mxu0 %v326
        %v433 = vpop.f32.mrf.mxu0
        %434 = vmatmul.f32.gmra.mxu0 %v329
        %v435 = vpop.f32.mrf.mxu0
        %436 = vmatmul.f32.gmra.mxu0 %v332
        %v437 = vpop.f32.mrf.mxu0
        %438 = vmatmul.f32.gmra.mxu0 %v335
        %v439 = vpop.f32.mrf.mxu0
        %440 = vdwg.mxu0
        %441 = vmatpush.msra.mxu0 0.0
        %442 = vmatpush.msra.mxu0 0.0
        %443 = vmatpush.msra.mxu0 0.0
        %444 = vmatpush.msra.mxu0 0.0
        %445 = vmatpush.msra.mxu0 0.0
        %446 = vmatpush.msra.mxu0 0.0
        %447 = vmatpush.msra.mxu0 0.0
        %448 = vmatpush.msra.mxu0 0.0
        %449 = vmatpush.msra.mxu0 0.0
        %450 = vmatpush.msra.mxu0 0.0
        %451 = vmatpush.msra.mxu0 0.0
        %452 = vmatpush.msra.mxu0 0.0
        %453 = vmatpush.msra.mxu0 0.0
        %454 = vmatpush.msra.mxu0 0.0
        %455 = vmatpush.msra.mxu0 0.0
        %456 = vmatpush.msra.mxu0 %v340
        %457 = vmatmul.f32.gmra.mxu0 %v242
        %v458 = vpop.f32.mrf.mxu0
        %v459 = vadd.f32 0.0, %v458
        %460 = vmatmul.f32.gmra.mxu0 %v245
        %v461 = vpop.f32.mrf.mxu0
        %v462 = vadd.f32 0.0, %v461
        %463 = vmatmul.f32.gmra.mxu0 %v248
        %v464 = vpop.f32.mrf.mxu0
        %v465 = vadd.f32 0.0, %v464
        %466 = vmatmul.f32.gmra.mxu0 %v251
        %v467 = vpop.f32.mrf.mxu0
        %v468 = vadd.f32 0.0, %v467
        %469 = vmatmul.f32.gmra.mxu0 %v254
        %v470 = vpop.f32.mrf.mxu0
        %v471 = vadd.f32 0.0, %v470
        %472 = vmatmul.f32.gmra.mxu0 %v257
        %v473 = vpop.f32.mrf.mxu0
        %v474 = vadd.f32 0.0, %v473
        %475 = vmatmul.f32.gmra.mxu0 %v260
        %v476 = vpop.f32.mrf.mxu0
        %v477 = vadd.f32 0.0, %v476
        %478 = vmatmul.f32.gmra.mxu0 %v263
        %v479 = vpop.f32.mrf.mxu0
        %v480 = vadd.f32 0.0, %v479
        %481 = vmatmul.f32.gmra.mxu0 %v266
        %v482 = vpop.f32.mrf.mxu0
        %v483 = vadd.f32 0.0, %v482
        %484 = vmatmul.f32.gmra.mxu0 %v269
        %v485 = vpop.f32.mrf.mxu0
        %v486 = vadd.f32 0.0, %v485
        %487 = vmatmul.f32.gmra.mxu0 %v272
        %v488 = vpop.f32.mrf.mxu0
        %v489 = vadd.f32 0.0, %v488
        %490 = vmatmul.f32.gmra.mxu0 %v275
        %v491 = vpop.f32.mrf.mxu0
        %v492 = vadd.f32 0.0, %v491
        %493 = vmatmul.f32.gmra.mxu0 %v278
        %v494 = vpop.f32.mrf.mxu0
        %v495 = vadd.f32 0.0, %v494
        %496 = vmatmul.f32.gmra.mxu0 %v281
        %v497 = vpop.f32.mrf.mxu0
        %v498 = vadd.f32 0.0, %v497
        %499 = vmatmul.f32.gmra.mxu0 %v284
        %v500 = vpop.f32.mrf.mxu0
        %v501 = vadd.f32 0.0, %v500
        %502 = vmatmul.f32.gmra.mxu0 %v287
        %v503 = vpop.f32.mrf.mxu0
        %v504 = vadd.f32 0.0, %v503
        %505 = vmatmul.f32.gmra.mxu0 %v290
        %v506 = vpop.f32.mrf.mxu0
        %v507 = vadd.f32 0.0, %v506
        %508 = vmatmul.f32.gmra.mxu0 %v293
        %v509 = vpop.f32.mrf.mxu0
        %v510 = vadd.f32 0.0, %v509
        %511 = vmatmul.f32.gmra.mxu0 %v296
        %v512 = vpop.f32.mrf.mxu0
        %v513 = vadd.f32 0.0, %v512
        %514 = vmatmul.f32.gmra.mxu0 %v299
        %v515 = vpop.f32.mrf.mxu0
        %v516 = vadd.f32 0.0, %v515
        %517 = vmatmul.f32.gmra.mxu0 %v302
        %v518 = vpop.f32.mrf.mxu0
        %v519 = vadd.f32 0.0, %v518
        %520 = vmatmul.f32.gmra.mxu0 %v305
        %v521 = vpop.f32.mrf.mxu0
        %v522 = vadd.f32 0.0, %v521
        %523 = vmatmul.f32.gmra.mxu0 %v308
        %v524 = vpop.f32.mrf.mxu0
        %v525 = vadd.f32 0.0, %v524
        %526 = vmatmul.f32.gmra.mxu0 %v311
        %v527 = vpop.f32.mrf.mxu0
        %v528 = vadd.f32 0.0, %v527
        %529 = vmatmul.f32.gmra.mxu0 %v314
        %v530 = vpop.f32.mrf.mxu0
        %v531 = vadd.f32 0.0, %v530
        %532 = vmatmul.f32.gmra.mxu0 %v317
        %v533 = vpop.f32.mrf.mxu0
        %v534 = vadd.f32 0.0, %v533
        %535 = vmatmul.f32.gmra.mxu0 %v320
        %v536 = vpop.f32.mrf.mxu0
        %v537 = vadd.f32 0.0, %v536
        %538 = vmatmul.f32.gmra.mxu0 %v323
        %v539 = vpop.f32.mrf.mxu0
        %v540 = vadd.f32 0.0, %v539
        %541 = vmatmul.f32.gmra.mxu0 %v326
        %v542 = vpop.f32.mrf.mxu0
        %v543 = vadd.f32 0.0, %v542
        %544 = vmatmul.f32.gmra.mxu0 %v329
        %v545 = vpop.f32.mrf.mxu0
        %v546 = vadd.f32 0.0, %v545
        %547 = vmatmul.f32.gmra.mxu0 %v332
        %v548 = vpop.f32.mrf.mxu0
        %v549 = vadd.f32 0.0, %v548
        %550 = vmatmul.f32.gmra.mxu0 %v335
        %v551 = vpop.f32.mrf.mxu0
        %552 = vdwg.mxu0
        %553 = vmatpush.msra.mxu0 0.0
        %554 = vmatpush.msra.mxu0 0.0
        %555 = vmatpush.msra.mxu0 0.0
        %556 = vmatpush.msra.mxu0 0.0
        %557 = vmatpush.msra.mxu0 0.0
        %558 = vmatpush.msra.mxu0 0.0
        %559 = vmatpush.msra.mxu0 0.0
        %560 = vmatpush.msra.mxu0 0.0
        %561 = vmatpush.msra.mxu0 0.0
        %562 = vmatpush.msra.mxu0 0.0
        %563 = vmatpush.msra.mxu0 0.0
        %564 = vmatpush.msra.mxu0 0.0
        %565 = vmatpush.msra.mxu0 0.0
        %566 = vmatpush.msra.mxu0 0.0
        %567 = vmatpush.msra.mxu0 0.0
        %568 = vmatpush.msra.mxu0 %v342
        %569 = vmatmul.f32.gmra.mxu0 %v242
        %v570 = vpop.f32.mrf.mxu0
        %v571 = vadd.f32 0.0, %v570
        %572 = vmatmul.f32.gmra.mxu0 %v245
        %v573 = vpop.f32.mrf.mxu0
        %v574 = vadd.f32 0.0, %v573
        %575 = vmatmul.f32.gmra.mxu0 %v248
        %v576 = vpop.f32.mrf.mxu0
        %v577 = vadd.f32 0.0, %v576
        %578 = vmatmul.f32.gmra.mxu0 %v251
        %v579 = vpop.f32.mrf.mxu0
        %v580 = vadd.f32 0.0, %v579
        %581 = vmatmul.f32.gmra.mxu0 %v254
        %v582 = vpop.f32.mrf.mxu0
        %v583 = vadd.f32 0.0, %v582
        %584 = vmatmul.f32.gmra.mxu0 %v257
        %v585 = vpop.f32.mrf.mxu0
        %v586 = vadd.f32 0.0, %v585
        %587 = vmatmul.f32.gmra.mxu0 %v260
        %v588 = vpop.f32.mrf.mxu0
        %v589 = vadd.f32 0.0, %v588
        %590 = vmatmul.f32.gmra.mxu0 %v263
        %v591 = vpop.f32.mrf.mxu0
        %v592 = vadd.f32 0.0, %v591
        %593 = vmatmul.f32.gmra.mxu0 %v266
        %v594 = vpop.f32.mrf.mxu0
        %v595 = vadd.f32 0.0, %v594
        %596 = vmatmul.f32.gmra.mxu0 %v269
        %v597 = vpop.f32.mrf.mxu0
        %v598 = vadd.f32 0.0, %v597
        %599 = vmatmul.f32.gmra.mxu0 %v272
        %v600 = vpop.f32.mrf.mxu0
        %v601 = vadd.f32 0.0, %v600
        %602 = vmatmul.f32.gmra.mxu0 %v275
        %v603 = vpop.f32.mrf.mxu0
        %v604 = vadd.f32 0.0, %v603
        %605 = vmatmul.f32.gmra.mxu0 %v278
        %v606 = vpop.f32.mrf.mxu0
        %v607 = vadd.f32 0.0, %v606
        %608 = vmatmul.f32.gmra.mxu0 %v281
        %v609 = vpop.f32.mrf.mxu0
        %v610 = vadd.f32 0.0, %v609
        %611 = vmatmul.f32.gmra.mxu0 %v284
        %v612 = vpop.f32.mrf.mxu0
        %v613 = vadd.f32 0.0, %v612
        %614 = vmatmul.f32.gmra.mxu0 %v287
        %v615 = vpop.f32.mrf.mxu0
        %v616 = vadd.f32 0.0, %v615
        %617 = vmatmul.f32.gmra.mxu0 %v290
        %v618 = vpop.f32.mrf.mxu0
        %v619 = vadd.f32 0.0, %v618
        %620 = vmatmul.f32.gmra.mxu0 %v293
        %v621 = vpop.f32.mrf.mxu0
        %v622 = vadd.f32 0.0, %v621
        %623 = vmatmul.f32.gmra.mxu0 %v296
        %v624 = vpop.f32.mrf.mxu0
        %v625 = vadd.f32 0.0, %v624
        %626 = vmatmul.f32.gmra.mxu0 %v299
        %v627 = vpop.f32.mrf.mxu0
        %v628 = vadd.f32 0.0, %v627
        %629 = vmatmul.f32.gmra.mxu0 %v302
        %v630 = vpop.f32.mrf.mxu0
        %v631 = vadd.f32 0.0, %v630
        %632 = vmatmul.f32.gmra.mxu0 %v305
        %v633 = vpop.f32.mrf.mxu0
        %v634 = vadd.f32 0.0, %v633
        %635 = vmatmul.f32.gmra.mxu0 %v308
        %v636 = vpop.f32.mrf.mxu0
        %v637 = vadd.f32 0.0, %v636
        %638 = vmatmul.f32.gmra.mxu0 %v311
        %v639 = vpop.f32.mrf.mxu0
        %v640 = vadd.f32 0.0, %v639
        %641 = vmatmul.f32.gmra.mxu0 %v314
        %v642 = vpop.f32.mrf.mxu0
        %v643 = vadd.f32 0.0, %v642
        %644 = vmatmul.f32.gmra.mxu0 %v317
        %v645 = vpop.f32.mrf.mxu0
        %v646 = vadd.f32 0.0, %v645
        %647 = vmatmul.f32.gmra.mxu0 %v320
        %v648 = vpop.f32.mrf.mxu0
        %v649 = vadd.f32 0.0, %v648
        %650 = vmatmul.f32.gmra.mxu0 %v323
        %v651 = vpop.f32.mrf.mxu0
        %v652 = vadd.f32 0.0, %v651
        %653 = vmatmul.f32.gmra.mxu0 %v326
        %v654 = vpop.f32.mrf.mxu0
        %v655 = vadd.f32 0.0, %v654
        %656 = vmatmul.f32.gmra.mxu0 %v329
        %v657 = vpop.f32.mrf.mxu0
        %v658 = vadd.f32 0.0, %v657
        %659 = vmatmul.f32.gmra.mxu0 %v332
        %v660 = vpop.f32.mrf.mxu0
        %v661 = vadd.f32 0.0, %v660
        %662 = vmatmul.f32.gmra.mxu0 %v335
        %v663 = vpop.f32.mrf.mxu0
        %664 = vdwg.mxu0
        %v665 = vld [vmem:[%s2] sm:$0xff]
        %v666 = vld [vmem:[%s2 + $0x8] sm:$0x1]
        %v667 = vperm.slane %v665, 0
        %v668 = vadd.f32 %v459, %v667
        %v669 = vadd.f32 %v462, %v667
        %v670 = vadd.f32 %v465, %v667
        %v671 = vadd.f32 %v468, %v667
        %v672 = vadd.f32 %v471, %v667
        %v673 = vadd.f32 %v474, %v667
        %v674 = vadd.f32 %v477, %v667
        %v675 = vadd.f32 %v480, %v667
        %v676 = vadd.f32 %v483, %v667
        %v677 = vadd.f32 %v486, %v667
        %v678 = vadd.f32 %v489, %v667
        %v679 = vadd.f32 %v492, %v667
        %v680 = vadd.f32 %v495, %v667
        %v681 = vadd.f32 %v498, %v667
        %v682 = vadd.f32 %v501, %v667
        %v683 = vadd.f32 %v504, %v667
        %v684 = vadd.f32 %v507, %v667
        %v685 = vadd.f32 %v510, %v667
        %v686 = vadd.f32 %v513, %v667
        %v687 = vadd.f32 %v516, %v667
        %v688 = vadd.f32 %v519, %v667
        %v689 = vadd.f32 %v522, %v667
        %v690 = vadd.f32 %v525, %v667
        %v691 = vadd.f32 %v528, %v667
        %vm716 = vcmask 1040384
        %v717 = vrot.slane %v668, 7
        %v718 = vrot.slane %v669, 7
        %v719 = vsel %vm716, %v717, %v718
        %v720 = vrot.slane %v670, 7
        %v721 = vsel %vm716, %v718, %v720
        %v722 = vrot.slane %v671, 7
        %v723 = vrot.slane %v672, 7
        %v724 = vsel %vm716, %v722, %v723
        %v725 = vrot.slane %v673, 7
        %v726 = vsel %vm716, %v723, %v725
        %v727 = vrot.slane %v674, 7
        %v728 = vrot.slane %v675, 7
        %v729 = vsel %vm716, %v727, %v728
        %v730 = vrot.slane %v676, 7
        %v731 = vsel %vm716, %v728, %v730
        %v732 = vrot.slane %v677, 7
        %v733 = vrot.slane %v678, 7
        %v734 = vsel %vm716, %v732, %v733
        %v735 = vrot.slane %v679, 7
        %v736 = vsel %vm716, %v733, %v735
        %v737 = vrot.slane %v680, 7
        %v738 = vrot.slane %v681, 7
        %v739 = vsel %vm716, %v737, %v738
        %v740 = vrot.slane %v682, 7
        %v741 = vsel %vm716, %v738, %v740
        %v742 = vrot.slane %v683, 7
        %v743 = vrot.slane %v684, 7
        %v744 = vsel %vm716, %v742, %v743
        %v745 = vrot.slane %v685, 7
        %v746 = vsel %vm716, %v743, %v745
        %v747 = vrot.slane %v686, 7
        %v748 = vrot.slane %v687, 7
        %v749 = vsel %vm716, %v747, %v748
        %v750 = vrot.slane %v688, 7
        %v751 = vsel %vm716, %v748, %v750
        %v752 = vrot.slane %v689, 7
        %v753 = vrot.slane %v690, 7
        %v754 = vsel %vm716, %v752, %v753
        %v755 = vrot.slane %v691, 7
        %v756 = vsel %vm716, %v753, %v755
        %v773 = vmul.f32 %v370, %v719
        %v774 = vmul.f32 %v373, %v721
        %v775 = vmul.f32 %v378, %v724
        %v776 = vmul.f32 %v381, %v726
        %v777 = vmul.f32 %v386, %v729
        %v778 = vmul.f32 %v389, %v731
        %v779 = vmul.f32 %v394, %v734
        %v780 = vmul.f32 %v397, %v736
        %v781 = vmul.f32 %v402, %v739
        %v782 = vmul.f32 %v405, %v741
        %v783 = vmul.f32 %v410, %v744
        %v784 = vmul.f32 %v413, %v746
        %v785 = vmul.f32 %v418, %v749
        %v786 = vmul.f32 %v421, %v751
        %v787 = vmul.f32 %v426, %v754
        %v788 = vmul.f32 %v429, %v756
        %v789 = vperm.slane %v665, 1
        %v790 = vadd.f32 %v462, %v789
        %v791 = vadd.f32 %v465, %v789
        %v792 = vadd.f32 %v471, %v789
        %v793 = vadd.f32 %v474, %v789
        %v794 = vadd.f32 %v480, %v789
        %v795 = vadd.f32 %v483, %v789
        %v796 = vadd.f32 %v489, %v789
        %v797 = vadd.f32 %v492, %v789
        %v798 = vadd.f32 %v498, %v789
        %v799 = vadd.f32 %v501, %v789
        %v800 = vadd.f32 %v507, %v789
        %v801 = vadd.f32 %v510, %v789
        %v802 = vadd.f32 %v516, %v789
        %v803 = vadd.f32 %v519, %v789
        %v804 = vadd.f32 %v525, %v789
        %v805 = vadd.f32 %v528, %v789
        %v806 = vmul.f32 %v370, %v790
        %v807 = vmul.f32 %v373, %v791
        %v808 = vmul.f32 %v378, %v792
        %v809 = vmul.f32 %v381, %v793
        %v810 = vmul.f32 %v386, %v794
        %v811 = vmul.f32 %v389, %v795
        %v812 = vmul.f32 %v394, %v796
        %v813 = vmul.f32 %v397, %v797
        %v814 = vmul.f32 %v402, %v798
        %v815 = vmul.f32 %v405, %v799
        %v816 = vmul.f32 %v410, %v800
        %v817 = vmul.f32 %v413, %v801
        %v818 = vmul.f32 %v418, %v802
        %v819 = vmul.f32 %v421, %v803
        %v820 = vmul.f32 %v426, %v804
        %v821 = vmul.f32 %v429, %v805
        %v822 = vmax.f32 %v773, %v806
        %v823 = vmax.f32 %v774, %v807
        %v824 = vmax.f32 %v775, %v808
        %v825 = vmax.f32 %v776, %v809
        %v826 = vmax.f32 %v777, %v810
        %v827 = vmax.f32 %v778, %v811
        %v828 = vmax.f32 %v779, %v812
        %v829 = vmax.f32 %v780, %v813
        %v830 = vmax.f32 %v781, %v814
        %v831 = vmax.f32 %v782, %v815
        %v832 = vmax.f32 %v783, %v816
        %v833 = vmax.f32 %v784, %v817
        %v834 = vmax.f32 %v785, %v818
        %v835 = vmax.f32 %v786, %v819
        %v836 = vmax.f32 %v787, %v820
        %v837 = vmax.f32 %v788, %v821
        %v838 = vperm.slane %v665, 2
        %v839 = vadd.f32 %v462, %v838
        %v840 = vadd.f32 %v465, %v838
        %v841 = vadd.f32 %v468, %v838
        %v842 = vadd.f32 %v471, %v838
        %v843 = vadd.f32 %v474, %v838
        %v844 = vadd.f32 %v477, %v838
        %v845 = vadd.f32 %v480, %v838
        %v846 = vadd.f32 %v483, %v838
        %v847 = vadd.f32 %v486, %v838
        %v848 = vadd.f32 %v489, %v838
        %v849 = vadd.f32 %v492, %v838
        %v850 = vadd.f32 %v495, %v838
        %v851 = vadd.f32 %v498, %v838
        %v852 = vadd.f32 %v501, %v838
        %v853 = vadd.f32 %v504, %v838
        %v854 = vadd.f32 %v507, %v838
        %v855 = vadd.f32 %v510, %v838
        %v856 = vadd.f32 %v513, %v838
        %v857 = vadd.f32 %v516, %v838
        %v858 = vadd.f32 %v519, %v838
        %v859 = vadd.f32 %v522, %v838
        %v860 = vadd.f32 %v525, %v838
        %v861 = vadd.f32 %v528, %v838
        %v862 = vadd.f32 %v531, %v838
        %vm887 = vcmask 1046528
        %v888 = vrot.slane %v839, 1
        %v889 = vrot.slane %v840, 1
        %v890 = vsel %vm887, %v888, %v889
        %v891 = vrot.slane %v841, 1
        %v892 = vsel %vm887, %v889, %v891
        %v893 = vrot.slane %v842, 1
        %v894 = vrot.slane %v843, 1
        %v895 = vsel %vm887, %v893, %v894
        %v896 = vrot.slane %v844, 1
        %v897 = vsel %vm887, %v894, %v896
        %v898 = vrot.slane %v845, 1
        %v899 = vrot.slane %v846, 1
        %v900 = vsel %vm887, %v898, %v899
        %v901 = vrot.slane %v847, 1
        %v902 = vsel %vm887, %v899, %v901
        %v903 = vrot.slane %v848, 1
        %v904 = vrot.slane %v849, 1
        %v905 = vsel %vm887, %v903, %v904
        %v906 = vrot.slane %v850, 1
        %v907 = vsel %vm887, %v904, %v906
        %v908 = vrot.slane %v851, 1
        %v909 = vrot.slane %v852, 1
        %v910 = vsel %vm887, %v908, %v909
        %v911 = vrot.slane %v853, 1
        %v912 = vsel %vm887, %v909, %v911
        %v913 = vrot.slane %v854, 1
        %v914 = vrot.slane %v855, 1
        %v915 = vsel %vm887, %v913, %v914
        %v916 = vrot.slane %v856, 1
        %v917 = vsel %vm887, %v914, %v916
        %v918 = vrot.slane %v857, 1
        %v919 = vrot.slane %v858, 1
        %v920 = vsel %vm887, %v918, %v919
        %v921 = vrot.slane %v859, 1
        %v922 = vsel %vm887, %v919, %v921
        %v923 = vrot.slane %v860, 1
        %v924 = vrot.slane %v861, 1
        %v925 = vsel %vm887, %v923, %v924
        %v926 = vrot.slane %v862, 1
        %v927 = vsel %vm887, %v924, %v926
        %v944 = vmul.f32 %v370, %v890
        %v945 = vmul.f32 %v373, %v892
        %v946 = vmul.f32 %v378, %v895
        %v947 = vmul.f32 %v381, %v897
        %v948 = vmul.f32 %v386, %v900
        %v949 = vmul.f32 %v389, %v902
        %v950 = vmul.f32 %v394, %v905
        %v951 = vmul.f32 %v397, %v907
        %v952 = vmul.f32 %v402, %v910
        %v953 = vmul.f32 %v405, %v912
        %v954 = vmul.f32 %v410, %v915
        %v955 = vmul.f32 %v413, %v917
        %v956 = vmul.f32 %v418, %v920
        %v957 = vmul.f32 %v421, %v922
        %v958 = vmul.f32 %v426, %v925
        %v959 = vmul.f32 %v429, %v927
        %v960 = vmax.f32 %v822, %v944
        %v961 = vmax.f32 %v823, %v945
        %v962 = vmax.f32 %v824, %v946
        %v963 = vmax.f32 %v825, %v947
        %v964 = vmax.f32 %v826, %v948
        %v965 = vmax.f32 %v827, %v949
        %v966 = vmax.f32 %v828, %v950
        %v967 = vmax.f32 %v829, %v951
        %v968 = vmax.f32 %v830, %v952
        %v969 = vmax.f32 %v831, %v953
        %v970 = vmax.f32 %v832, %v954
        %v971 = vmax.f32 %v833, %v955
        %v972 = vmax.f32 %v834, %v956
        %v973 = vmax.f32 %v835, %v957
        %v974 = vmax.f32 %v836, %v958
        %v975 = vmax.f32 %v837, %v959
        %v976 = vperm.slane %v665, 3
        %v977 = vadd.f32 %v468, %v976
        %v978 = vadd.f32 %v471, %v976
        %v979 = vadd.f32 %v474, %v976
        %v980 = vadd.f32 %v477, %v976
        %v981 = vadd.f32 %v480, %v976
        %v982 = vadd.f32 %v483, %v976
        %v983 = vadd.f32 %v486, %v976
        %v984 = vadd.f32 %v489, %v976
        %v985 = vadd.f32 %v492, %v976
        %v986 = vadd.f32 %v495, %v976
        %v987 = vadd.f32 %v498, %v976
        %v988 = vadd.f32 %v501, %v976
        %v989 = vadd.f32 %v504, %v976
        %v990 = vadd.f32 %v507, %v976
        %v991 = vadd.f32 %v510, %v976
        %v992 = vadd.f32 %v513, %v976
        %v993 = vadd.f32 %v516, %v976
        %v994 = vadd.f32 %v519, %v976
        %v995 = vadd.f32 %v522, %v976
        %v996 = vadd.f32 %v525, %v976
        %v997 = vadd.f32 %v528, %v976
        %v998 = vadd.f32 %v531, %v976
        %v999 = vadd.f32 %v534, %v976
        %v1000 = vadd.f32 %v537, %v976
        %v1025 = vrot.slane %v977, 7
        %v1026 = vrot.slane %v978, 7
        %v1027 = vsel %vm716, %v1025, %v1026
        %v1028 = vrot.slane %v979, 7
        %v1029 = vsel %vm716, %v1026, %v1028
        %v1030 = vrot.slane %v980, 7
        %v1031 = vrot.slane %v981, 7
        %v1032 = vsel %vm716, %v1030, %v1031
        %v1033 = vrot.slane %v982, 7
        %v1034 = vsel %vm716, %v1031, %v1033
        %v1035 = vrot.slane %v983, 7
        %v1036 = vrot.slane %v984, 7
        %v1037 = vsel %vm716, %v1035, %v1036
        %v1038 = vrot.slane %v985, 7
        %v1039 = vsel %vm716, %v1036, %v1038
        %v1040 = vrot.slane %v986, 7
        %v1041 = vrot.slane %v987, 7
        %v1042 = vsel %vm716, %v1040, %v1041
        %v1043 = vrot.slane %v988, 7
        %v1044 = vsel %vm716, %v1041, %v1043
        %v1045 = vrot.slane %v989, 7
        %v1046 = vrot.slane %v990, 7
        %v1047 = vsel %vm716, %v1045, %v1046
        %v1048 = vrot.slane %v991, 7
        %v1049 = vsel %vm716, %v1046, %v1048
        %v1050 = vrot.slane %v992, 7
        %v1051 = vrot.slane %v993, 7
        %v1052 = vsel %vm716, %v1050, %v1051
        %v1053 = vrot.slane %v994, 7
        %v1054 = vsel %vm716, %v1051, %v1053
        %v1055 = vrot.slane %v995, 7
        %v1056 = vrot.slane %v996, 7
        %v1057 = vsel %vm716, %v1055, %v1056
        %v1058 = vrot.slane %v997, 7
        %v1059 = vsel %vm716, %v1056, %v1058
        %v1060 = vrot.slane %v998, 7
        %v1061 = vrot.slane %v999, 7
        %v1062 = vsel %vm716, %v1060, %v1061
        %v1063 = vrot.slane %v1000, 7
        %v1064 = vsel %vm716, %v1061, %v1063
        %v1081 = vmul.f32 %v370, %v1027
        %v1082 = vmul.f32 %v373, %v1029
        %v1083 = vmul.f32 %v378, %v1032
        %v1084 = vmul.f32 %v381, %v1034
        %v1085 = vmul.f32 %v386, %v1037
        %v1086 = vmul.f32 %v389, %v1039
        %v1087 = vmul.f32 %v394, %v1042
        %v1088 = vmul.f32 %v397, %v1044
        %v1089 = vmul.f32 %v402, %v1047
        %v1090 = vmul.f32 %v405, %v1049
        %v1091 = vmul.f32 %v410, %v1052
        %v1092 = vmul.f32 %v413, %v1054
        %v1093 = vmul.f32 %v418, %v1057
        %v1094 = vmul.f32 %v421, %v1059
        %v1095 = vmul.f32 %v426, %v1062
        %v1096 = vmul.f32 %v429, %v1064
        %v1097 = vmax.f32 %v960, %v1081
        %v1098 = vmax.f32 %v961, %v1082
        %v1099 = vmax.f32 %v962, %v1083
        %v1100 = vmax.f32 %v963, %v1084
        %v1101 = vmax.f32 %v964, %v1085
        %v1102 = vmax.f32 %v965, %v1086
        %v1103 = vmax.f32 %v966, %v1087
        %v1104 = vmax.f32 %v967, %v1088
        %v1105 = vmax.f32 %v968, %v1089
        %v1106 = vmax.f32 %v969, %v1090
        %v1107 = vmax.f32 %v970, %v1091
        %v1108 = vmax.f32 %v971, %v1092
        %v1109 = vmax.f32 %v972, %v1093
        %v1110 = vmax.f32 %v973, %v1094
        %v1111 = vmax.f32 %v974, %v1095
        %v1112 = vmax.f32 %v975, %v1096
        %v1113 = vperm.slane %v665, 4
        %v1114 = vadd.f32 %v471, %v1113
        %v1115 = vadd.f32 %v474, %v1113
        %v1116 = vadd.f32 %v480, %v1113
        %v1117 = vadd.f32 %v483, %v1113
        %v1118 = vadd.f32 %v489, %v1113
        %v1119 = vadd.f32 %v492, %v1113
        %v1120 = vadd.f32 %v498, %v1113
        %v1121 = vadd.f32 %v501, %v1113
        %v1122 = vadd.f32 %v507, %v1113
        %v1123 = vadd.f32 %v510, %v1113
        %v1124 = vadd.f32 %v516, %v1113
        %v1125 = vadd.f32 %v519, %v1113
        %v1126 = vadd.f32 %v525, %v1113
        %v1127 = vadd.f32 %v528, %v1113
        %v1128 = vadd.f32 %v534, %v1113
        %v1129 = vadd.f32 %v537, %v1113
        %v1130 = vmul.f32 %v370, %v1114
        %v1131 = vmul.f32 %v373, %v1115
        %v1132 = vmul.f32 %v378, %v1116
        %v1133 = vmul.f32 %v381, %v1117
        %v1134 = vmul.f32 %v386, %v1118
        %v1135 = vmul.f32 %v389, %v1119
        %v1136 = vmul.f32 %v394, %v1120
        %v1137 = vmul.f32 %v397, %v1121
        %v1138 = vmul.f32 %v402, %v1122
        %v1139 = vmul.f32 %v405, %v1123
        %v1140 = vmul.f32 %v410, %v1124
        %v1141 = vmul.f32 %v413, %v1125
        %v1142 = vmul.f32 %v418, %v1126
        %v1143 = vmul.f32 %v421, %v1127
        %v1144 = vmul.f32 %v426, %v1128
        %v1145 = vmul.f32 %v429, %v1129
        %v1146 = vmax.f32 %v1097, %v1130
        %v1147 = vmax.f32 %v1098, %v1131
        %v1148 = vmax.f32 %v1099, %v1132
        %v1149 = vmax.f32 %v1100, %v1133
        %v1150 = vmax.f32 %v1101, %v1134
        %v1151 = vmax.f32 %v1102, %v1135
        %v1152 = vmax.f32 %v1103, %v1136
        %v1153 = vmax.f32 %v1104, %v1137
        %v1154 = vmax.f32 %v1105, %v1138
        %v1155 = vmax.f32 %v1106, %v1139
        %v1156 = vmax.f32 %v1107, %v1140
        %v1157 = vmax.f32 %v1108, %v1141
        %v1158 = vmax.f32 %v1109, %v1142
        %v1159 = vmax.f32 %v1110, %v1143
        %v1160 = vmax.f32 %v1111, %v1144
        %v1161 = vmax.f32 %v1112, %v1145
        %v1162 = vperm.slane %v665, 5
        %v1163 = vadd.f32 %v471, %v1162
        %v1164 = vadd.f32 %v474, %v1162
        %v1165 = vadd.f32 %v477, %v1162
        %v1166 = vadd.f32 %v480, %v1162
        %v1167 = vadd.f32 %v483, %v1162
        %v1168 = vadd.f32 %v486, %v1162
        %v1169 = vadd.f32 %v489, %v1162
        %v1170 = vadd.f32 %v492, %v1162
        %v1171 = vadd.f32 %v495, %v1162
        %v1172 = vadd.f32 %v498, %v1162
        %v1173 = vadd.f32 %v501, %v1162
        %v1174 = vadd.f32 %v504, %v1162
        %v1175 = vadd.f32 %v507, %v1162
        %v1176 = vadd.f32 %v510, %v1162
        %v1177 = vadd.f32 %v513, %v1162
        %v1178 = vadd.f32 %v516, %v1162
        %v1179 = vadd.f32 %v519, %v1162
        %v1180 = vadd.f32 %v522, %v1162
        %v1181 = vadd.f32 %v525, %v1162
        %v1182 = vadd.f32 %v528, %v1162
        %v1183 = vadd.f32 %v531, %v1162
        %v1184 = vadd.f32 %v534, %v1162
        %v1185 = vadd.f32 %v537, %v1162
        %v1186 = vadd.f32 %v540, %v1162
        %v1211 = vrot.slane %v1163, 1
        %v1212 = vrot.slane %v1164, 1
        %v1213 = vsel %vm887, %v1211, %v1212
        %v1214 = vrot.slane %v1165, 1
        %v1215 = vsel %vm887, %v1212, %v1214
        %v1216 = vrot.slane %v1166, 1
        %v1217 = vrot.slane %v1167, 1
        %v1218 = vsel %vm887, %v1216, %v1217
        %v1219 = vrot.slane %v1168, 1
        %v1220 = vsel %vm887, %v1217, %v1219
        %v1221 = vrot.slane %v1169, 1
        %v1222 = vrot.slane %v1170, 1
        %v1223 = vsel %vm887, %v1221, %v1222
        %v1224 = vrot.slane %v1171, 1
        %v1225 = vsel %vm887, %v1222, %v1224
        %v1226 = vrot.slane %v1172, 1
        %v1227 = vrot.slane %v1173, 1
        %v1228 = vsel %vm887, %v1226, %v1227
        %v1229 = vrot.slane %v1174, 1
        %v1230 = vsel %vm887, %v1227, %v1229
        %v1231 = vrot.slane %v1175, 1
        %v1232 = vrot.slane %v1176, 1
        %v1233 = vsel %vm887, %v1231, %v1232
        %v1234 = vrot.slane %v1177, 1
        %v1235 = vsel %vm887, %v1232, %v1234
        %v1236 = vrot.slane %v1178, 1
        %v1237 = vrot.slane %v1179, 1
        %v1238 = vsel %vm887, %v1236, %v1237
        %v1239 = vrot.slane %v1180, 1
        %v1240 = vsel %vm887, %v1237, %v1239
        %v1241 = vrot.slane %v1181, 1
        %v1242 = vrot.slane %v1182, 1
        %v1243 = vsel %vm887, %v1241, %v1242
        %v1244 = vrot.slane %v1183, 1
        %v1245 = vsel %vm887, %v1242, %v1244
        %v1246 = vrot.slane %v1184, 1
        %v1247 = vrot.slane %v1185, 1
        %v1248 = vsel %vm887, %v1246, %v1247
        %v1249 = vrot.slane %v1186, 1
        %v1250 = vsel %vm887, %v1247, %v1249
        %v1267 = vmul.f32 %v370, %v1213
        %v1268 = vmul.f32 %v373, %v1215
        %v1269 = vmul.f32 %v378, %v1218
        %v1270 = vmul.f32 %v381, %v1220
        %v1271 = vmul.f32 %v386, %v1223
        %v1272 = vmul.f32 %v389, %v1225
        %v1273 = vmul.f32 %v394, %v1228
        %v1274 = vmul.f32 %v397, %v1230
        %v1275 = vmul.f32 %v402, %v1233
        %v1276 = vmul.f32 %v405, %v1235
        %v1277 = vmul.f32 %v410, %v1238
        %v1278 = vmul.f32 %v413, %v1240
        %v1279 = vmul.f32 %v418, %v1243
        %v1280 = vmul.f32 %v421, %v1245
        %v1281 = vmul.f32 %v426, %v1248
        %v1282 = vmul.f32 %v429, %v1250
        %v1283 = vmax.f32 %v1146, %v1267
        %v1284 = vmax.f32 %v1147, %v1268
        %v1285 = vmax.f32 %v1148, %v1269
        %v1286 = vmax.f32 %v1149, %v1270
        %v1287 = vmax.f32 %v1150, %v1271
        %v1288 = vmax.f32 %v1151, %v1272
        %v1289 = vmax.f32 %v1152, %v1273
        %v1290 = vmax.f32 %v1153, %v1274
        %v1291 = vmax.f32 %v1154, %v1275
        %v1292 = vmax.f32 %v1155, %v1276
        %v1293 = vmax.f32 %v1156, %v1277
        %v1294 = vmax.f32 %v1157, %v1278
        %v1295 = vmax.f32 %v1158, %v1279
        %v1296 = vmax.f32 %v1159, %v1280
        %v1297 = vmax.f32 %v1160, %v1281
        %v1298 = vmax.f32 %v1161, %v1282
        %v1299 = vperm.slane %v665, 6
        %v1300 = vadd.f32 %v477, %v1299
        %v1301 = vadd.f32 %v480, %v1299
        %v1302 = vadd.f32 %v483, %v1299
        %v1303 = vadd.f32 %v486, %v1299
        %v1304 = vadd.f32 %v489, %v1299
        %v1305 = vadd.f32 %v492, %v1299
        %v1306 = vadd.f32 %v495, %v1299
        %v1307 = vadd.f32 %v498, %v1299
        %v1308 = vadd.f32 %v501, %v1299
        %v1309 = vadd.f32 %v504, %v1299
        %v1310 = vadd.f32 %v507, %v1299
        %v1311 = vadd.f32 %v510, %v1299
        %v1312 = vadd.f32 %v513, %v1299
        %v1313 = vadd.f32 %v516, %v1299
        %v1314 = vadd.f32 %v519, %v1299
        %v1315 = vadd.f32 %v522, %v1299
        %v1316 = vadd.f32 %v525, %v1299
        %v1317 = vadd.f32 %v528, %v1299
        %v1318 = vadd.f32 %v531, %v1299
        %v1319 = vadd.f32 %v534, %v1299
        %v1320 = vadd.f32 %v537, %v1299
        %v1321 = vadd.f32 %v540, %v1299
        %v1322 = vadd.f32 %v543, %v1299
        %v1323 = vadd.f32 %v546, %v1299
        %v1348 = vrot.slane %v1300, 7
        %v1349 = vrot.slane %v1301, 7
        %v1350 = vsel %vm716, %v1348, %v1349
        %v1351 = vrot.slane %v1302, 7
        %v1352 = vsel %vm716, %v1349, %v1351
        %v1353 = vrot.slane %v1303, 7
        %v1354 = vrot.slane %v1304, 7
        %v1355 = vsel %vm716, %v1353, %v1354
        %v1356 = vrot.slane %v1305, 7
        %v1357 = vsel %vm716, %v1354, %v1356
        %v1358 = vrot.slane %v1306, 7
        %v1359 = vrot.slane %v1307, 7
        %v1360 = vsel %vm716, %v1358, %v1359
        %v1361 = vrot.slane %v1308, 7
        %v1362 = vsel %vm716, %v1359, %v1361
        %v1363 = vrot.slane %v1309, 7
        %v1364 = vrot.slane %v1310, 7
        %v1365 = vsel %vm716, %v1363, %v1364
        %v1366 = vrot.slane %v1311, 7
        %v1367 = vsel %vm716, %v1364, %v1366
        %v1368 = vrot.slane %v1312, 7
        %v1369 = vrot.slane %v1313, 7
        %v1370 = vsel %vm716, %v1368, %v1369
        %v1371 = vrot.slane %v1314, 7
        %v1372 = vsel %vm716, %v1369, %v1371
        %v1373 = vrot.slane %v1315, 7
        %v1374 = vrot.slane %v1316, 7
        %v1375 = vsel %vm716, %v1373, %v1374
        %v1376 = vrot.slane %v1317, 7
        %v1377 = vsel %vm716, %v1374, %v1376
        %v1378 = vrot.slane %v1318, 7
        %v1379 = vrot.slane %v1319, 7
        %v1380 = vsel %vm716, %v1378, %v1379
        %v1381 = vrot.slane %v1320, 7
        %v1382 = vsel %vm716, %v1379, %v1381
        %v1383 = vrot.slane %v1321, 7
        %v1384 = vrot.slane %v1322, 7
        %v1385 = vsel %vm716, %v1383, %v1384
        %v1386 = vrot.slane %v1323, 7
        %v1387 = vsel %vm716, %v1384, %v1386
        %v1404 = vmul.f32 %v370, %v1350
        %v1405 = vmul.f32 %v373, %v1352
        %v1406 = vmul.f32 %v378, %v1355
        %v1407 = vmul.f32 %v381, %v1357
        %v1408 = vmul.f32 %v386, %v1360
        %v1409 = vmul.f32 %v389, %v1362
        %v1410 = vmul.f32 %v394, %v1365
        %v1411 = vmul.f32 %v397, %v1367
        %v1412 = vmul.f32 %v402, %v1370
        %v1413 = vmul.f32 %v405, %v1372
        %v1414 = vmul.f32 %v410, %v1375
        %v1415 = vmul.f32 %v413, %v1377
        %v1416 = vmul.f32 %v418, %v1380
        %v1417 = vmul.f32 %v421, %v1382
        %v1418 = vmul.f32 %v426, %v1385
        %v1419 = vmul.f32 %v429, %v1387
        %v1420 = vmax.f32 %v1283, %v1404
        %v1421 = vmax.f32 %v1284, %v1405
        %v1422 = vmax.f32 %v1285, %v1406
        %v1423 = vmax.f32 %v1286, %v1407
        %v1424 = vmax.f32 %v1287, %v1408
        %v1425 = vmax.f32 %v1288, %v1409
        %v1426 = vmax.f32 %v1289, %v1410
        %v1427 = vmax.f32 %v1290, %v1411
        %v1428 = vmax.f32 %v1291, %v1412
        %v1429 = vmax.f32 %v1292, %v1413
        %v1430 = vmax.f32 %v1293, %v1414
        %v1431 = vmax.f32 %v1294, %v1415
        %v1432 = vmax.f32 %v1295, %v1416
        %v1433 = vmax.f32 %v1296, %v1417
        %v1434 = vmax.f32 %v1297, %v1418
        %v1435 = vmax.f32 %v1298, %v1419
        %v1436 = vperm.slane %v665, 7
        %v1437 = vadd.f32 %v480, %v1436
        %v1438 = vadd.f32 %v483, %v1436
        %v1439 = vadd.f32 %v489, %v1436
        %v1440 = vadd.f32 %v492, %v1436
        %v1441 = vadd.f32 %v498, %v1436
        %v1442 = vadd.f32 %v501, %v1436
        %v1443 = vadd.f32 %v507, %v1436
        %v1444 = vadd.f32 %v510, %v1436
        %v1445 = vadd.f32 %v516, %v1436
        %v1446 = vadd.f32 %v519, %v1436
        %v1447 = vadd.f32 %v525, %v1436
        %v1448 = vadd.f32 %v528, %v1436
        %v1449 = vadd.f32 %v534, %v1436
        %v1450 = vadd.f32 %v537, %v1436
        %v1451 = vadd.f32 %v543, %v1436
        %v1452 = vadd.f32 %v546, %v1436
        %v1453 = vmul.f32 %v370, %v1437
        %v1454 = vmul.f32 %v373, %v1438
        %v1455 = vmul.f32 %v378, %v1439
        %v1456 = vmul.f32 %v381, %v1440
        %v1457 = vmul.f32 %v386, %v1441
        %v1458 = vmul.f32 %v389, %v1442
        %v1459 = vmul.f32 %v394, %v1443
        %v1460 = vmul.f32 %v397, %v1444
        %v1461 = vmul.f32 %v402, %v1445
        %v1462 = vmul.f32 %v405, %v1446
        %v1463 = vmul.f32 %v410, %v1447
        %v1464 = vmul.f32 %v413, %v1448
        %v1465 = vmul.f32 %v418, %v1449
        %v1466 = vmul.f32 %v421, %v1450
        %v1467 = vmul.f32 %v426, %v1451
        %v1468 = vmul.f32 %v429, %v1452
        %v1469 = vmax.f32 %v1420, %v1453
        %v1470 = vmax.f32 %v1421, %v1454
        %v1471 = vmax.f32 %v1422, %v1455
        %v1472 = vmax.f32 %v1423, %v1456
        %v1473 = vmax.f32 %v1424, %v1457
        %v1474 = vmax.f32 %v1425, %v1458
        %v1475 = vmax.f32 %v1426, %v1459
        %v1476 = vmax.f32 %v1427, %v1460
        %v1477 = vmax.f32 %v1428, %v1461
        %v1478 = vmax.f32 %v1429, %v1462
        %v1479 = vmax.f32 %v1430, %v1463
        %v1480 = vmax.f32 %v1431, %v1464
        %v1481 = vmax.f32 %v1432, %v1465
        %v1482 = vmax.f32 %v1433, %v1466
        %v1483 = vmax.f32 %v1434, %v1467
        %v1484 = vmax.f32 %v1435, %v1468
        %v1485 = vperm.slane %v666, 0
        %v1486 = vadd.f32 %v480, %v1485
        %v1487 = vadd.f32 %v483, %v1485
        %v1488 = vadd.f32 %v486, %v1485
        %v1489 = vadd.f32 %v489, %v1485
        %v1490 = vadd.f32 %v492, %v1485
        %v1491 = vadd.f32 %v495, %v1485
        %v1492 = vadd.f32 %v498, %v1485
        %v1493 = vadd.f32 %v501, %v1485
        %v1494 = vadd.f32 %v504, %v1485
        %v1495 = vadd.f32 %v507, %v1485
        %v1496 = vadd.f32 %v510, %v1485
        %v1497 = vadd.f32 %v513, %v1485
        %v1498 = vadd.f32 %v516, %v1485
        %v1499 = vadd.f32 %v519, %v1485
        %v1500 = vadd.f32 %v522, %v1485
        %v1501 = vadd.f32 %v525, %v1485
        %v1502 = vadd.f32 %v528, %v1485
        %v1503 = vadd.f32 %v531, %v1485
        %v1504 = vadd.f32 %v534, %v1485
        %v1505 = vadd.f32 %v537, %v1485
        %v1506 = vadd.f32 %v540, %v1485
        %v1507 = vadd.f32 %v543, %v1485
        %v1508 = vadd.f32 %v546, %v1485
        %v1509 = vadd.f32 %v549, %v1485
        %v1534 = vrot.slane %v1486, 1
        %v1535 = vrot.slane %v1487, 1
        %v1536 = vsel %vm887, %v1534, %v1535
        %v1537 = vrot.slane %v1488, 1
        %v1538 = vsel %vm887, %v1535, %v1537
        %v1539 = vrot.slane %v1489, 1
        %v1540 = vrot.slane %v1490, 1
        %v1541 = vsel %vm887, %v1539, %v1540
        %v1542 = vrot.slane %v1491, 1
        %v1543 = vsel %vm887, %v1540, %v1542
        %v1544 = vrot.slane %v1492, 1
        %v1545 = vrot.slane %v1493, 1
        %v1546 = vsel %vm887, %v1544, %v1545
        %v1547 = vrot.slane %v1494, 1
        %v1548 = vsel %vm887, %v1545, %v1547
        %v1549 = vrot.slane %v1495, 1
        %v1550 = vrot.slane %v1496, 1
        %v1551 = vsel %vm887, %v1549, %v1550
        %v1552 = vrot.slane %v1497, 1
        %v1553 = vsel %vm887, %v1550, %v1552
        %v1554 = vrot.slane %v1498, 1
        %v1555 = vrot.slane %v1499, 1
        %v1556 = vsel %vm887, %v1554, %v1555
        %v1557 = vrot.slane %v1500, 1
        %v1558 = vsel %vm887, %v1555, %v1557
        %v1559 = vrot.slane %v1501, 1
        %v1560 = vrot.slane %v1502, 1
        %v1561 = vsel %vm887, %v1559, %v1560
        %v1562 = vrot.slane %v1503, 1
        %v1563 = vsel %vm887, %v1560, %v1562
        %v1564 = vrot.slane %v1504, 1
        %v1565 = vrot.slane %v1505, 1
        %v1566 = vsel %vm887, %v1564, %v1565
        %v1567 = vrot.slane %v1506, 1
        %v1568 = vsel %vm887, %v1565, %v1567
        %v1569 = vrot.slane %v1507, 1
        %v1570 = vrot.slane %v1508, 1
        %v1571 = vsel %vm887, %v1569, %v1570
        %v1572 = vrot.slane %v1509, 1
        %v1573 = vsel %vm887, %v1570, %v1572
        %v1590 = vmul.f32 %v370, %v1536
        %v1591 = vmul.f32 %v373, %v1538
        %v1592 = vmul.f32 %v378, %v1541
        %v1593 = vmul.f32 %v381, %v1543
        %v1594 = vmul.f32 %v386, %v1546
        %v1595 = vmul.f32 %v389, %v1548
        %v1596 = vmul.f32 %v394, %v1551
        %v1597 = vmul.f32 %v397, %v1553
        %v1598 = vmul.f32 %v402, %v1556
        %v1599 = vmul.f32 %v405, %v1558
        %v1600 = vmul.f32 %v410, %v1561
        %v1601 = vmul.f32 %v413, %v1563
        %v1602 = vmul.f32 %v418, %v1566
        %v1603 = vmul.f32 %v421, %v1568
        %v1604 = vmul.f32 %v426, %v1571
        %v1605 = vmul.f32 %v429, %v1573
        %v1606 = vmax.f32 %v1469, %v1590
        %v1607 = vmax.f32 %v1470, %v1591
        %v1608 = vmax.f32 %v1471, %v1592
        %v1609 = vmax.f32 %v1472, %v1593
        %v1610 = vmax.f32 %v1473, %v1594
        %v1611 = vmax.f32 %v1474, %v1595
        %v1612 = vmax.f32 %v1475, %v1596
        %v1613 = vmax.f32 %v1476, %v1597
        %v1614 = vmax.f32 %v1477, %v1598
        %v1615 = vmax.f32 %v1478, %v1599
        %v1616 = vmax.f32 %v1479, %v1600
        %v1617 = vmax.f32 %v1480, %v1601
        %v1618 = vmax.f32 %v1481, %v1602
        %v1619 = vmax.f32 %v1482, %v1603
        %v1620 = vmax.f32 %v1483, %v1604
        %v1621 = vmax.f32 %v1484, %v1605
        %v1622 = vsub.f32 %v773, %v1606
        %v1623 = vsub.f32 %v774, %v1607
        %v1624 = vsub.f32 %v775, %v1608
        %v1625 = vsub.f32 %v776, %v1609
        %v1626 = vsub.f32 %v777, %v1610
        %v1627 = vsub.f32 %v778, %v1611
        %v1628 = vsub.f32 %v779, %v1612
        %v1629 = vsub.f32 %v780, %v1613
        %v1630 = vsub.f32 %v781, %v1614
        %v1631 = vsub.f32 %v782, %v1615
        %v1632 = vsub.f32 %v783, %v1616
        %v1633 = vsub.f32 %v784, %v1617
        %v1634 = vsub.f32 %v785, %v1618
        %v1635 = vsub.f32 %v786, %v1619
        %v1636 = vsub.f32 %v787, %v1620
        %v1637 = vsub.f32 %v788, %v1621
        %v1638 = vmul.f32 %v1622, 1.442695
        %v1639 = vpow.pop %v1638
        %v1640 = vmul.f32 %v1623, 1.442695
        %v1641 = vpow.pop %v1640
        %v1642 = vmul.f32 %v1624, 1.442695
        %v1643 = vpow.pop %v1642
        %v1644 = vmul.f32 %v1625, 1.442695
        %v1645 = vpow.pop %v1644
        %v1646 = vmul.f32 %v1626, 1.442695
        %v1647 = vpow.pop %v1646
        %v1648 = vmul.f32 %v1627, 1.442695
        %v1649 = vpow.pop %v1648
        %v1650 = vmul.f32 %v1628, 1.442695
        %v1651 = vpow.pop %v1650
        %v1652 = vmul.f32 %v1629, 1.442695
        %v1653 = vpow.pop %v1652
        %v1654 = vmul.f32 %v1630, 1.442695
        %v1655 = vpow.pop %v1654
        %v1656 = vmul.f32 %v1631, 1.442695
        %v1657 = vpow.pop %v1656
        %v1658 = vmul.f32 %v1632, 1.442695
        %v1659 = vpow.pop %v1658
        %v1660 = vmul.f32 %v1633, 1.442695
        %v1661 = vpow.pop %v1660
        %v1662 = vmul.f32 %v1634, 1.442695
        %v1663 = vpow.pop %v1662
        %v1664 = vmul.f32 %v1635, 1.442695
        %v1665 = vpow.pop %v1664
        %v1666 = vmul.f32 %v1636, 1.442695
        %v1667 = vpow.pop %v1666
        %v1668 = vmul.f32 %v1637, 1.442695
        %v1669 = vpow.pop %v1668
        %v1694 = vrot.slane %v571, 7
        %v1695 = vrot.slane %v574, 7
        %v1696 = vsel %vm716, %v1694, %v1695
        %v1697 = vrot.slane %v577, 7
        %v1698 = vsel %vm716, %v1695, %v1697
        %v1699 = vrot.slane %v580, 7
        %v1700 = vrot.slane %v583, 7
        %v1701 = vsel %vm716, %v1699, %v1700
        %v1702 = vrot.slane %v586, 7
        %v1703 = vsel %vm716, %v1700, %v1702
        %v1704 = vrot.slane %v589, 7
        %v1705 = vrot.slane %v592, 7
        %v1706 = vsel %vm716, %v1704, %v1705
        %v1707 = vrot.slane %v595, 7
        %v1708 = vsel %vm716, %v1705, %v1707
        %v1709 = vrot.slane %v598, 7
        %v1710 = vrot.slane %v601, 7
        %v1711 = vsel %vm716, %v1709, %v1710
        %v1712 = vrot.slane %v604, 7
        %v1713 = vsel %vm716, %v1710, %v1712
        %v1714 = vrot.slane %v607, 7
        %v1715 = vrot.slane %v610, 7
        %v1716 = vsel %vm716, %v1714, %v1715
        %v1717 = vrot.slane %v613, 7
        %v1718 = vsel %vm716, %v1715, %v1717
        %v1719 = vrot.slane %v616, 7
        %v1720 = vrot.slane %v619, 7
        %v1721 = vsel %vm716, %v1719, %v1720
        %v1722 = vrot.slane %v622, 7
        %v1723 = vsel %vm716, %v1720, %v1722
        %v1724 = vrot.slane %v625, 7
        %v1725 = vrot.slane %v628, 7
        %v1726 = vsel %vm716, %v1724, %v1725
        %v1727 = vrot.slane %v631, 7
        %v1728 = vsel %vm716, %v1725, %v1727
        %v1729 = vrot.slane %v634, 7
        %v1730 = vrot.slane %v637, 7
        %v1731 = vsel %vm716, %v1729, %v1730
        %v1732 = vrot.slane %v640, 7
        %v1733 = vsel %vm716, %v1730, %v1732
        %v1750 = vmul.f32 %v1639, %v1696
        %v1751 = vmul.f32 %v1641, %v1698
        %v1752 = vmul.f32 %v1643, %v1701
        %v1753 = vmul.f32 %v1645, %v1703
        %v1754 = vmul.f32 %v1647, %v1706
        %v1755 = vmul.f32 %v1649, %v1708
        %v1756 = vmul.f32 %v1651, %v1711
        %v1757 = vmul.f32 %v1653, %v1713
        %v1758 = vmul.f32 %v1655, %v1716
        %v1759 = vmul.f32 %v1657, %v1718
        %v1760 = vmul.f32 %v1659, %v1721
        %v1761 = vmul.f32 %v1661, %v1723
        %v1762 = vmul.f32 %v1663, %v1726
        %v1763 = vmul.f32 %v1665, %v1728
        %v1764 = vmul.f32 %v1667, %v1731
        %v1765 = vmul.f32 %v1669, %v1733
        %v1766 = vsub.f32 %v806, %v1606
        %v1767 = vsub.f32 %v807, %v1607
        %v1768 = vsub.f32 %v808, %v1608
        %v1769 = vsub.f32 %v809, %v1609
        %v1770 = vsub.f32 %v810, %v1610
        %v1771 = vsub.f32 %v811, %v1611
        %v1772 = vsub.f32 %v812, %v1612
        %v1773 = vsub.f32 %v813, %v1613
        %v1774 = vsub.f32 %v814, %v1614
        %v1775 = vsub.f32 %v815, %v1615
        %v1776 = vsub.f32 %v816, %v1616
        %v1777 = vsub.f32 %v817, %v1617
        %v1778 = vsub.f32 %v818, %v1618
        %v1779 = vsub.f32 %v819, %v1619
        %v1780 = vsub.f32 %v820, %v1620
        %v1781 = vsub.f32 %v821, %v1621
        %v1782 = vmul.f32 %v1766, 1.442695
        %v1783 = vpow.pop %v1782
        %v1784 = vmul.f32 %v1767, 1.442695
        %v1785 = vpow.pop %v1784
        %v1786 = vmul.f32 %v1768, 1.442695
        %v1787 = vpow.pop %v1786
        %v1788 = vmul.f32 %v1769, 1.442695
        %v1789 = vpow.pop %v1788
        %v1790 = vmul.f32 %v1770, 1.442695
        %v1791 = vpow.pop %v1790
        %v1792 = vmul.f32 %v1771, 1.442695
        %v1793 = vpow.pop %v1792
        %v1794 = vmul.f32 %v1772, 1.442695
        %v1795 = vpow.pop %v1794
        %v1796 = vmul.f32 %v1773, 1.442695
        %v1797 = vpow.pop %v1796
        %v1798 = vmul.f32 %v1774, 1.442695
        %v1799 = vpow.pop %v1798
        %v1800 = vmul.f32 %v1775, 1.442695
        %v1801 = vpow.pop %v1800
        %v1802 = vmul.f32 %v1776, 1.442695
        %v1803 = vpow.pop %v1802
        %v1804 = vmul.f32 %v1777, 1.442695
        %v1805 = vpow.pop %v1804
        %v1806 = vmul.f32 %v1778, 1.442695
        %v1807 = vpow.pop %v1806
        %v1808 = vmul.f32 %v1779, 1.442695
        %v1809 = vpow.pop %v1808
        %v1810 = vmul.f32 %v1780, 1.442695
        %v1811 = vpow.pop %v1810
        %v1812 = vmul.f32 %v1781, 1.442695
        %v1813 = vpow.pop %v1812
        %v1814 = vmul.f32 %v1783, %v574
        %v1815 = vmul.f32 %v1785, %v577
        %v1816 = vmul.f32 %v1787, %v583
        %v1817 = vmul.f32 %v1789, %v586
        %v1818 = vmul.f32 %v1791, %v592
        %v1819 = vmul.f32 %v1793, %v595
        %v1820 = vmul.f32 %v1795, %v601
        %v1821 = vmul.f32 %v1797, %v604
        %v1822 = vmul.f32 %v1799, %v610
        %v1823 = vmul.f32 %v1801, %v613
        %v1824 = vmul.f32 %v1803, %v619
        %v1825 = vmul.f32 %v1805, %v622
        %v1826 = vmul.f32 %v1807, %v628
        %v1827 = vmul.f32 %v1809, %v631
        %v1828 = vmul.f32 %v1811, %v637
        %v1829 = vmul.f32 %v1813, %v640
        %v1830 = vadd.f32 %v1639, %v1783
        %v1831 = vadd.f32 %v1641, %v1785
        %v1832 = vadd.f32 %v1643, %v1787
        %v1833 = vadd.f32 %v1645, %v1789
        %v1834 = vadd.f32 %v1647, %v1791
        %v1835 = vadd.f32 %v1649, %v1793
        %v1836 = vadd.f32 %v1651, %v1795
        %v1837 = vadd.f32 %v1653, %v1797
        %v1838 = vadd.f32 %v1655, %v1799
        %v1839 = vadd.f32 %v1657, %v1801
        %v1840 = vadd.f32 %v1659, %v1803
        %v1841 = vadd.f32 %v1661, %v1805
        %v1842 = vadd.f32 %v1663, %v1807
        %v1843 = vadd.f32 %v1665, %v1809
        %v1844 = vadd.f32 %v1667, %v1811
        %v1845 = vadd.f32 %v1669, %v1813
        %v1846 = vadd.f32 %v1750, %v1814
        %v1847 = vadd.f32 %v1751, %v1815
        %v1848 = vadd.f32 %v1752, %v1816
        %v1849 = vadd.f32 %v1753, %v1817
        %v1850 = vadd.f32 %v1754, %v1818
        %v1851 = vadd.f32 %v1755, %v1819
        %v1852 = vadd.f32 %v1756, %v1820
        %v1853 = vadd.f32 %v1757, %v1821
        %v1854 = vadd.f32 %v1758, %v1822
        %v1855 = vadd.f32 %v1759, %v1823
        %v1856 = vadd.f32 %v1760, %v1824
        %v1857 = vadd.f32 %v1761, %v1825
        %v1858 = vadd.f32 %v1762, %v1826
        %v1859 = vadd.f32 %v1763, %v1827
        %v1860 = vadd.f32 %v1764, %v1828
        %v1861 = vadd.f32 %v1765, %v1829
        %v1862 = vsub.f32 %v944, %v1606
        %v1863 = vsub.f32 %v945, %v1607
        %v1864 = vsub.f32 %v946, %v1608
        %v1865 = vsub.f32 %v947, %v1609
        %v1866 = vsub.f32 %v948, %v1610
        %v1867 = vsub.f32 %v949, %v1611
        %v1868 = vsub.f32 %v950, %v1612
        %v1869 = vsub.f32 %v951, %v1613
        %v1870 = vsub.f32 %v952, %v1614
        %v1871 = vsub.f32 %v953, %v1615
        %v1872 = vsub.f32 %v954, %v1616
        %v1873 = vsub.f32 %v955, %v1617
        %v1874 = vsub.f32 %v956, %v1618
        %v1875 = vsub.f32 %v957, %v1619
        %v1876 = vsub.f32 %v958, %v1620
        %v1877 = vsub.f32 %v959, %v1621
        %v1878 = vmul.f32 %v1862, 1.442695
        %v1879 = vpow.pop %v1878
        %v1880 = vmul.f32 %v1863, 1.442695
        %v1881 = vpow.pop %v1880
        %v1882 = vmul.f32 %v1864, 1.442695
        %v1883 = vpow.pop %v1882
        %v1884 = vmul.f32 %v1865, 1.442695
        %v1885 = vpow.pop %v1884
        %v1886 = vmul.f32 %v1866, 1.442695
        %v1887 = vpow.pop %v1886
        %v1888 = vmul.f32 %v1867, 1.442695
        %v1889 = vpow.pop %v1888
        %v1890 = vmul.f32 %v1868, 1.442695
        %v1891 = vpow.pop %v1890
        %v1892 = vmul.f32 %v1869, 1.442695
        %v1893 = vpow.pop %v1892
        %v1894 = vmul.f32 %v1870, 1.442695
        %v1895 = vpow.pop %v1894
        %v1896 = vmul.f32 %v1871, 1.442695
        %v1897 = vpow.pop %v1896
        %v1898 = vmul.f32 %v1872, 1.442695
        %v1899 = vpow.pop %v1898
        %v1900 = vmul.f32 %v1873, 1.442695
        %v1901 = vpow.pop %v1900
        %v1902 = vmul.f32 %v1874, 1.442695
        %v1903 = vpow.pop %v1902
        %v1904 = vmul.f32 %v1875, 1.442695
        %v1905 = vpow.pop %v1904
        %v1906 = vmul.f32 %v1876, 1.442695
        %v1907 = vpow.pop %v1906
        %v1908 = vmul.f32 %v1877, 1.442695
        %v1909 = vpow.pop %v1908
        %v1911 = vrot.slane %v574, 1
        %v1912 = vrot.slane %v577, 1
        %v1913 = vsel %vm887, %v1911, %v1912
        %v1914 = vrot.slane %v580, 1
        %v1915 = vsel %vm887, %v1912, %v1914
        %v1916 = vrot.slane %v583, 1
        %v1917 = vrot.slane %v586, 1
        %v1918 = vsel %vm887, %v1916, %v1917
        %v1919 = vrot.slane %v589, 1
        %v1920 = vsel %vm887, %v1917, %v1919
        %v1921 = vrot.slane %v592, 1
        %v1922 = vrot.slane %v595, 1
        %v1923 = vsel %vm887, %v1921, %v1922
        %v1924 = vrot.slane %v598, 1
        %v1925 = vsel %vm887, %v1922, %v1924
        %v1926 = vrot.slane %v601, 1
        %v1927 = vrot.slane %v604, 1
        %v1928 = vsel %vm887, %v1926, %v1927
        %v1929 = vrot.slane %v607, 1
        %v1930 = vsel %vm887, %v1927, %v1929
        %v1931 = vrot.slane %v610, 1
        %v1932 = vrot.slane %v613, 1
        %v1933 = vsel %vm887, %v1931, %v1932
        %v1934 = vrot.slane %v616, 1
        %v1935 = vsel %vm887, %v1932, %v1934
        %v1936 = vrot.slane %v619, 1
        %v1937 = vrot.slane %v622, 1
        %v1938 = vsel %vm887, %v1936, %v1937
        %v1939 = vrot.slane %v625, 1
        %v1940 = vsel %vm887, %v1937, %v1939
        %v1941 = vrot.slane %v628, 1
        %v1942 = vrot.slane %v631, 1
        %v1943 = vsel %vm887, %v1941, %v1942
        %v1944 = vrot.slane %v634, 1
        %v1945 = vsel %vm887, %v1942, %v1944
        %v1946 = vrot.slane %v637, 1
        %v1947 = vrot.slane %v640, 1
        %v1948 = vsel %vm887, %v1946, %v1947
        %v1949 = vrot.slane %v643, 1
        %v1950 = vsel %vm887, %v1947, %v1949
        %v1967 = vmul.f32 %v1879, %v1913
        %v1968 = vmul.f32 %v1881, %v1915
        %v1969 = vmul.f32 %v1883, %v1918
        %v1970 = vmul.f32 %v1885, %v1920
        %v1971 = vmul.f32 %v1887, %v1923
        %v1972 = vmul.f32 %v1889, %v1925
        %v1973 = vmul.f32 %v1891, %v1928
        %v1974 = vmul.f32 %v1893, %v1930
        %v1975 = vmul.f32 %v1895, %v1933
        %v1976 = vmul.f32 %v1897, %v1935
        %v1977 = vmul.f32 %v1899, %v1938
        %v1978 = vmul.f32 %v1901, %v1940
        %v1979 = vmul.f32 %v1903, %v1943
        %v1980 = vmul.f32 %v1905, %v1945
        %v1981 = vmul.f32 %v1907, %v1948
        %v1982 = vmul.f32 %v1909, %v1950
        %v1983 = vadd.f32 %v1830, %v1879
        %v1984 = vadd.f32 %v1831, %v1881
        %v1985 = vadd.f32 %v1832, %v1883
        %v1986 = vadd.f32 %v1833, %v1885
        %v1987 = vadd.f32 %v1834, %v1887
        %v1988 = vadd.f32 %v1835, %v1889
        %v1989 = vadd.f32 %v1836, %v1891
        %v1990 = vadd.f32 %v1837, %v1893
        %v1991 = vadd.f32 %v1838, %v1895
        %v1992 = vadd.f32 %v1839, %v1897
        %v1993 = vadd.f32 %v1840, %v1899
        %v1994 = vadd.f32 %v1841, %v1901
        %v1995 = vadd.f32 %v1842, %v1903
        %v1996 = vadd.f32 %v1843, %v1905
        %v1997 = vadd.f32 %v1844, %v1907
        %v1998 = vadd.f32 %v1845, %v1909
        %v1999 = vadd.f32 %v1846, %v1967
        %v2000 = vadd.f32 %v1847, %v1968
        %v2001 = vadd.f32 %v1848, %v1969
        %v2002 = vadd.f32 %v1849, %v1970
        %v2003 = vadd.f32 %v1850, %v1971
        %v2004 = vadd.f32 %v1851, %v1972
        %v2005 = vadd.f32 %v1852, %v1973
        %v2006 = vadd.f32 %v1853, %v1974
        %v2007 = vadd.f32 %v1854, %v1975
        %v2008 = vadd.f32 %v1855, %v1976
        %v2009 = vadd.f32 %v1856, %v1977
        %v2010 = vadd.f32 %v1857, %v1978
        %v2011 = vadd.f32 %v1858, %v1979
        %v2012 = vadd.f32 %v1859, %v1980
        %v2013 = vadd.f32 %v1860, %v1981
        %v2014 = vadd.f32 %v1861, %v1982
        %v2015 = vsub.f32 %v1081, %v1606
        %v2016 = vsub.f32 %v1082, %v1607
        %v2017 = vsub.f32 %v1083, %v1608
        %v2018 = vsub.f32 %v1084, %v1609
        %v2019 = vsub.f32 %v1085, %v1610
        %v2020 = vsub.f32 %v1086, %v1611
        %v2021 = vsub.f32 %v1087, %v1612
        %v2022 = vsub.f32 %v1088, %v1613
        %v2023 = vsub.f32 %v1089, %v1614
        %v2024 = vsub.f32 %v1090, %v1615
        %v2025 = vsub.f32 %v1091, %v1616
        %v2026 = vsub.f32 %v1092, %v1617
        %v2027 = vsub.f32 %v1093, %v1618
        %v2028 = vsub.f32 %v1094, %v1619
        %v2029 = vsub.f32 %v1095, %v1620
        %v2030 = vsub.f32 %v1096, %v1621
        %v2031 = vmul.f32 %v2015, 1.442695
        %v2032 = vpow.pop %v2031
        %v2033 = vmul.f32 %v2016, 1.442695
        %v2034 = vpow.pop %v2033
        %v2035 = vmul.f32 %v2017, 1.442695
        %v2036 = vpow.pop %v2035
        %v2037 = vmul.f32 %v2018, 1.442695
        %v2038 = vpow.pop %v2037
        %v2039 = vmul.f32 %v2019, 1.442695
        %v2040 = vpow.pop %v2039
        %v2041 = vmul.f32 %v2020, 1.442695
        %v2042 = vpow.pop %v2041
        %v2043 = vmul.f32 %v2021, 1.442695
        %v2044 = vpow.pop %v2043
        %v2045 = vmul.f32 %v2022, 1.442695
        %v2046 = vpow.pop %v2045
        %v2047 = vmul.f32 %v2023, 1.442695
        %v2048 = vpow.pop %v2047
        %v2049 = vmul.f32 %v2024, 1.442695
        %v2050 = vpow.pop %v2049
        %v2051 = vmul.f32 %v2025, 1.442695
        %v2052 = vpow.pop %v2051
        %v2053 = vmul.f32 %v2026, 1.442695
        %v2054 = vpow.pop %v2053
        %v2055 = vmul.f32 %v2027, 1.442695
        %v2056 = vpow.pop %v2055
        %v2057 = vmul.f32 %v2028, 1.442695
        %v2058 = vpow.pop %v2057
        %v2059 = vmul.f32 %v2029, 1.442695
        %v2060 = vpow.pop %v2059
        %v2061 = vmul.f32 %v2030, 1.442695
        %v2062 = vpow.pop %v2061
        %v2065 = vrot.slane %v643, 7
        %v2066 = vrot.slane %v646, 7
        %v2067 = vsel %vm716, %v2065, %v2066
        %v2068 = vrot.slane %v649, 7
        %v2069 = vsel %vm716, %v2066, %v2068
        %v2072 = vmul.f32 %v2032, %v1701
        %v2073 = vmul.f32 %v2034, %v1703
        %v2074 = vmul.f32 %v2036, %v1706
        %v2075 = vmul.f32 %v2038, %v1708
        %v2076 = vmul.f32 %v2040, %v1711
        %v2077 = vmul.f32 %v2042, %v1713
        %v2078 = vmul.f32 %v2044, %v1716
        %v2079 = vmul.f32 %v2046, %v1718
        %v2080 = vmul.f32 %v2048, %v1721
        %v2081 = vmul.f32 %v2050, %v1723
        %v2082 = vmul.f32 %v2052, %v1726
        %v2083 = vmul.f32 %v2054, %v1728
        %v2084 = vmul.f32 %v2056, %v1731
        %v2085 = vmul.f32 %v2058, %v1733
        %v2086 = vmul.f32 %v2060, %v2067
        %v2087 = vmul.f32 %v2062, %v2069
        %v2088 = vadd.f32 %v1983, %v2032
        %v2089 = vadd.f32 %v1984, %v2034
        %v2090 = vadd.f32 %v1985, %v2036
        %v2091 = vadd.f32 %v1986, %v2038
        %v2092 = vadd.f32 %v1987, %v2040
        %v2093 = vadd.f32 %v1988, %v2042
        %v2094 = vadd.f32 %v1989, %v2044
        %v2095 = vadd.f32 %v1990, %v2046
        %v2096 = vadd.f32 %v1991, %v2048
        %v2097 = vadd.f32 %v1992, %v2050
        %v2098 = vadd.f32 %v1993, %v2052
        %v2099 = vadd.f32 %v1994, %v2054
        %v2100 = vadd.f32 %v1995, %v2056
        %v2101 = vadd.f32 %v1996, %v2058
        %v2102 = vadd.f32 %v1997, %v2060
        %v2103 = vadd.f32 %v1998, %v2062
        %v2104 = vadd.f32 %v1999, %v2072
        %v2105 = vadd.f32 %v2000, %v2073
        %v2106 = vadd.f32 %v2001, %v2074
        %v2107 = vadd.f32 %v2002, %v2075
        %v2108 = vadd.f32 %v2003, %v2076
        %v2109 = vadd.f32 %v2004, %v2077
        %v2110 = vadd.f32 %v2005, %v2078
        %v2111 = vadd.f32 %v2006, %v2079
        %v2112 = vadd.f32 %v2007, %v2080
        %v2113 = vadd.f32 %v2008, %v2081
        %v2114 = vadd.f32 %v2009, %v2082
        %v2115 = vadd.f32 %v2010, %v2083
        %v2116 = vadd.f32 %v2011, %v2084
        %v2117 = vadd.f32 %v2012, %v2085
        %v2118 = vadd.f32 %v2013, %v2086
        %v2119 = vadd.f32 %v2014, %v2087
        %v2120 = vsub.f32 %v1130, %v1606
        %v2121 = vsub.f32 %v1131, %v1607
        %v2122 = vsub.f32 %v1132, %v1608
        %v2123 = vsub.f32 %v1133, %v1609
        %v2124 = vsub.f32 %v1134, %v1610
        %v2125 = vsub.f32 %v1135, %v1611
        %v2126 = vsub.f32 %v1136, %v1612
        %v2127 = vsub.f32 %v1137, %v1613
        %v2128 = vsub.f32 %v1138, %v1614
        %v2129 = vsub.f32 %v1139, %v1615
        %v2130 = vsub.f32 %v1140, %v1616
        %v2131 = vsub.f32 %v1141, %v1617
        %v2132 = vsub.f32 %v1142, %v1618
        %v2133 = vsub.f32 %v1143, %v1619
        %v2134 = vsub.f32 %v1144, %v1620
        %v2135 = vsub.f32 %v1145, %v1621
        %v2136 = vmul.f32 %v2120, 1.442695
        %v2137 = vpow.pop %v2136
        %v2138 = vmul.f32 %v2121, 1.442695
        %v2139 = vpow.pop %v2138
        %v2140 = vmul.f32 %v2122, 1.442695
        %v2141 = vpow.pop %v2140
        %v2142 = vmul.f32 %v2123, 1.442695
        %v2143 = vpow.pop %v2142
        %v2144 = vmul.f32 %v2124, 1.442695
        %v2145 = vpow.pop %v2144
        %v2146 = vmul.f32 %v2125, 1.442695
        %v2147 = vpow.pop %v2146
        %v2148 = vmul.f32 %v2126, 1.442695
        %v2149 = vpow.pop %v2148
        %v2150 = vmul.f32 %v2127, 1.442695
        %v2151 = vpow.pop %v2150
        %v2152 = vmul.f32 %v2128, 1.442695
        %v2153 = vpow.pop %v2152
        %v2154 = vmul.f32 %v2129, 1.442695
        %v2155 = vpow.pop %v2154
        %v2156 = vmul.f32 %v2130, 1.442695
        %v2157 = vpow.pop %v2156
        %v2158 = vmul.f32 %v2131, 1.442695
        %v2159 = vpow.pop %v2158
        %v2160 = vmul.f32 %v2132, 1.442695
        %v2161 = vpow.pop %v2160
        %v2162 = vmul.f32 %v2133, 1.442695
        %v2163 = vpow.pop %v2162
        %v2164 = vmul.f32 %v2134, 1.442695
        %v2165 = vpow.pop %v2164
        %v2166 = vmul.f32 %v2135, 1.442695
        %v2167 = vpow.pop %v2166
        %v2168 = vmul.f32 %v2137, %v583
        %v2169 = vmul.f32 %v2139, %v586
        %v2170 = vmul.f32 %v2141, %v592
        %v2171 = vmul.f32 %v2143, %v595
        %v2172 = vmul.f32 %v2145, %v601
        %v2173 = vmul.f32 %v2147, %v604
        %v2174 = vmul.f32 %v2149, %v610
        %v2175 = vmul.f32 %v2151, %v613
        %v2176 = vmul.f32 %v2153, %v619
        %v2177 = vmul.f32 %v2155, %v622
        %v2178 = vmul.f32 %v2157, %v628
        %v2179 = vmul.f32 %v2159, %v631
        %v2180 = vmul.f32 %v2161, %v637
        %v2181 = vmul.f32 %v2163, %v640
        %v2182 = vmul.f32 %v2165, %v646
        %v2183 = vmul.f32 %v2167, %v649
        %v2184 = vadd.f32 %v2088, %v2137
        %v2185 = vadd.f32 %v2089, %v2139
        %v2186 = vadd.f32 %v2090, %v2141
        %v2187 = vadd.f32 %v2091, %v2143
        %v2188 = vadd.f32 %v2092, %v2145
        %v2189 = vadd.f32 %v2093, %v2147
        %v2190 = vadd.f32 %v2094, %v2149
        %v2191 = vadd.f32 %v2095, %v2151
        %v2192 = vadd.f32 %v2096, %v2153
        %v2193 = vadd.f32 %v2097, %v2155
        %v2194 = vadd.f32 %v2098, %v2157
        %v2195 = vadd.f32 %v2099, %v2159
        %v2196 = vadd.f32 %v2100, %v2161
        %v2197 = vadd.f32 %v2101, %v2163
        %v2198 = vadd.f32 %v2102, %v2165
        %v2199 = vadd.f32 %v2103, %v2167
        %v2200 = vadd.f32 %v2104, %v2168
        %v2201 = vadd.f32 %v2105, %v2169
        %v2202 = vadd.f32 %v2106, %v2170
        %v2203 = vadd.f32 %v2107, %v2171
        %v2204 = vadd.f32 %v2108, %v2172
        %v2205 = vadd.f32 %v2109, %v2173
        %v2206 = vadd.f32 %v2110, %v2174
        %v2207 = vadd.f32 %v2111, %v2175
        %v2208 = vadd.f32 %v2112, %v2176
        %v2209 = vadd.f32 %v2113, %v2177
        %v2210 = vadd.f32 %v2114, %v2178
        %v2211 = vadd.f32 %v2115, %v2179
        %v2212 = vadd.f32 %v2116, %v2180
        %v2213 = vadd.f32 %v2117, %v2181
        %v2214 = vadd.f32 %v2118, %v2182
        %v2215 = vadd.f32 %v2119, %v2183
        %v2216 = vsub.f32 %v1267, %v1606
        %v2217 = vsub.f32 %v1268, %v1607
        %v2218 = vsub.f32 %v1269, %v1608
        %v2219 = vsub.f32 %v1270, %v1609
        %v2220 = vsub.f32 %v1271, %v1610
        %v2221 = vsub.f32 %v1272, %v1611
        %v2222 = vsub.f32 %v1273, %v1612
        %v2223 = vsub.f32 %v1274, %v1613
        %v2224 = vsub.f32 %v1275, %v1614
        %v2225 = vsub.f32 %v1276, %v1615
        %v2226 = vsub.f32 %v1277, %v1616
        %v2227 = vsub.f32 %v1278, %v1617
        %v2228 = vsub.f32 %v1279, %v1618
        %v2229 = vsub.f32 %v1280, %v1619
        %v2230 = vsub.f32 %v1281, %v1620
        %v2231 = vsub.f32 %v1282, %v1621
        %v2232 = vmul.f32 %v2216, 1.442695
        %v2233 = vpow.pop %v2232
        %v2234 = vmul.f32 %v2217, 1.442695
        %v2235 = vpow.pop %v2234
        %v2236 = vmul.f32 %v2218, 1.442695
        %v2237 = vpow.pop %v2236
        %v2238 = vmul.f32 %v2219, 1.442695
        %v2239 = vpow.pop %v2238
        %v2240 = vmul.f32 %v2220, 1.442695
        %v2241 = vpow.pop %v2240
        %v2242 = vmul.f32 %v2221, 1.442695
        %v2243 = vpow.pop %v2242
        %v2244 = vmul.f32 %v2222, 1.442695
        %v2245 = vpow.pop %v2244
        %v2246 = vmul.f32 %v2223, 1.442695
        %v2247 = vpow.pop %v2246
        %v2248 = vmul.f32 %v2224, 1.442695
        %v2249 = vpow.pop %v2248
        %v2250 = vmul.f32 %v2225, 1.442695
        %v2251 = vpow.pop %v2250
        %v2252 = vmul.f32 %v2226, 1.442695
        %v2253 = vpow.pop %v2252
        %v2254 = vmul.f32 %v2227, 1.442695
        %v2255 = vpow.pop %v2254
        %v2256 = vmul.f32 %v2228, 1.442695
        %v2257 = vpow.pop %v2256
        %v2258 = vmul.f32 %v2229, 1.442695
        %v2259 = vpow.pop %v2258
        %v2260 = vmul.f32 %v2230, 1.442695
        %v2261 = vpow.pop %v2260
        %v2262 = vmul.f32 %v2231, 1.442695
        %v2263 = vpow.pop %v2262
        %v2265 = vrot.slane %v646, 1
        %v2266 = vrot.slane %v649, 1
        %v2267 = vsel %vm887, %v2265, %v2266
        %v2268 = vrot.slane %v652, 1
        %v2269 = vsel %vm887, %v2266, %v2268
        %v2272 = vmul.f32 %v2233, %v1918
        %v2273 = vmul.f32 %v2235, %v1920
        %v2274 = vmul.f32 %v2237, %v1923
        %v2275 = vmul.f32 %v2239, %v1925
        %v2276 = vmul.f32 %v2241, %v1928
        %v2277 = vmul.f32 %v2243, %v1930
        %v2278 = vmul.f32 %v2245, %v1933
        %v2279 = vmul.f32 %v2247, %v1935
        %v2280 = vmul.f32 %v2249, %v1938
        %v2281 = vmul.f32 %v2251, %v1940
        %v2282 = vmul.f32 %v2253, %v1943
        %v2283 = vmul.f32 %v2255, %v1945
        %v2284 = vmul.f32 %v2257, %v1948
        %v2285 = vmul.f32 %v2259, %v1950
        %v2286 = vmul.f32 %v2261, %v2267
        %v2287 = vmul.f32 %v2263, %v2269
        %v2288 = vadd.f32 %v2184, %v2233
        %v2289 = vadd.f32 %v2185, %v2235
        %v2290 = vadd.f32 %v2186, %v2237
        %v2291 = vadd.f32 %v2187, %v2239
        %v2292 = vadd.f32 %v2188, %v2241
        %v2293 = vadd.f32 %v2189, %v2243
        %v2294 = vadd.f32 %v2190, %v2245
        %v2295 = vadd.f32 %v2191, %v2247
        %v2296 = vadd.f32 %v2192, %v2249
        %v2297 = vadd.f32 %v2193, %v2251
        %v2298 = vadd.f32 %v2194, %v2253
        %v2299 = vadd.f32 %v2195, %v2255
        %v2300 = vadd.f32 %v2196, %v2257
        %v2301 = vadd.f32 %v2197, %v2259
        %v2302 = vadd.f32 %v2198, %v2261
        %v2303 = vadd.f32 %v2199, %v2263
        %v2304 = vadd.f32 %v2200, %v2272
        %v2305 = vadd.f32 %v2201, %v2273
        %v2306 = vadd.f32 %v2202, %v2274
        %v2307 = vadd.f32 %v2203, %v2275
        %v2308 = vadd.f32 %v2204, %v2276
        %v2309 = vadd.f32 %v2205, %v2277
        %v2310 = vadd.f32 %v2206, %v2278
        %v2311 = vadd.f32 %v2207, %v2279
        %v2312 = vadd.f32 %v2208, %v2280
        %v2313 = vadd.f32 %v2209, %v2281
        %v2314 = vadd.f32 %v2210, %v2282
        %v2315 = vadd.f32 %v2211, %v2283
        %v2316 = vadd.f32 %v2212, %v2284
        %v2317 = vadd.f32 %v2213, %v2285
        %v2318 = vadd.f32 %v2214, %v2286
        %v2319 = vadd.f32 %v2215, %v2287
        %v2320 = vsub.f32 %v1404, %v1606
        %v2321 = vsub.f32 %v1405, %v1607
        %v2322 = vsub.f32 %v1406, %v1608
        %v2323 = vsub.f32 %v1407, %v1609
        %v2324 = vsub.f32 %v1408, %v1610
        %v2325 = vsub.f32 %v1409, %v1611
        %v2326 = vsub.f32 %v1410, %v1612
        %v2327 = vsub.f32 %v1411, %v1613
        %v2328 = vsub.f32 %v1412, %v1614
        %v2329 = vsub.f32 %v1413, %v1615
        %v2330 = vsub.f32 %v1414, %v1616
        %v2331 = vsub.f32 %v1415, %v1617
        %v2332 = vsub.f32 %v1416, %v1618
        %v2333 = vsub.f32 %v1417, %v1619
        %v2334 = vsub.f32 %v1418, %v1620
        %v2335 = vsub.f32 %v1419, %v1621
        %v2336 = vmul.f32 %v2320, 1.442695
        %v2337 = vpow.pop %v2336
        %v2338 = vmul.f32 %v2321, 1.442695
        %v2339 = vpow.pop %v2338
        %v2340 = vmul.f32 %v2322, 1.442695
        %v2341 = vpow.pop %v2340
        %v2342 = vmul.f32 %v2323, 1.442695
        %v2343 = vpow.pop %v2342
        %v2344 = vmul.f32 %v2324, 1.442695
        %v2345 = vpow.pop %v2344
        %v2346 = vmul.f32 %v2325, 1.442695
        %v2347 = vpow.pop %v2346
        %v2348 = vmul.f32 %v2326, 1.442695
        %v2349 = vpow.pop %v2348
        %v2350 = vmul.f32 %v2327, 1.442695
        %v2351 = vpow.pop %v2350
        %v2352 = vmul.f32 %v2328, 1.442695
        %v2353 = vpow.pop %v2352
        %v2354 = vmul.f32 %v2329, 1.442695
        %v2355 = vpow.pop %v2354
        %v2356 = vmul.f32 %v2330, 1.442695
        %v2357 = vpow.pop %v2356
        %v2358 = vmul.f32 %v2331, 1.442695
        %v2359 = vpow.pop %v2358
        %v2360 = vmul.f32 %v2332, 1.442695
        %v2361 = vpow.pop %v2360
        %v2362 = vmul.f32 %v2333, 1.442695
        %v2363 = vpow.pop %v2362
        %v2364 = vmul.f32 %v2334, 1.442695
        %v2365 = vpow.pop %v2364
        %v2366 = vmul.f32 %v2335, 1.442695
        %v2367 = vpow.pop %v2366
        %v2370 = vrot.slane %v652, 7
        %v2371 = vrot.slane %v655, 7
        %v2372 = vsel %vm716, %v2370, %v2371
        %v2373 = vrot.slane %v658, 7
        %v2374 = vsel %vm716, %v2371, %v2373
        %v2377 = vmul.f32 %v2337, %v1706
        %v2378 = vmul.f32 %v2339, %v1708
        %v2379 = vmul.f32 %v2341, %v1711
        %v2380 = vmul.f32 %v2343, %v1713
        %v2381 = vmul.f32 %v2345, %v1716
        %v2382 = vmul.f32 %v2347, %v1718
        %v2383 = vmul.f32 %v2349, %v1721
        %v2384 = vmul.f32 %v2351, %v1723
        %v2385 = vmul.f32 %v2353, %v1726
        %v2386 = vmul.f32 %v2355, %v1728
        %v2387 = vmul.f32 %v2357, %v1731
        %v2388 = vmul.f32 %v2359, %v1733
        %v2389 = vmul.f32 %v2361, %v2067
        %v2390 = vmul.f32 %v2363, %v2069
        %v2391 = vmul.f32 %v2365, %v2372
        %v2392 = vmul.f32 %v2367, %v2374
        %v2393 = vadd.f32 %v2288, %v2337
        %v2394 = vadd.f32 %v2289, %v2339
        %v2395 = vadd.f32 %v2290, %v2341
        %v2396 = vadd.f32 %v2291, %v2343
        %v2397 = vadd.f32 %v2292, %v2345
        %v2398 = vadd.f32 %v2293, %v2347
        %v2399 = vadd.f32 %v2294, %v2349
        %v2400 = vadd.f32 %v2295, %v2351
        %v2401 = vadd.f32 %v2296, %v2353
        %v2402 = vadd.f32 %v2297, %v2355
        %v2403 = vadd.f32 %v2298, %v2357
        %v2404 = vadd.f32 %v2299, %v2359
        %v2405 = vadd.f32 %v2300, %v2361
        %v2406 = vadd.f32 %v2301, %v2363
        %v2407 = vadd.f32 %v2302, %v2365
        %v2408 = vadd.f32 %v2303, %v2367
        %v2409 = vadd.f32 %v2304, %v2377
        %v2410 = vadd.f32 %v2305, %v2378
        %v2411 = vadd.f32 %v2306, %v2379
        %v2412 = vadd.f32 %v2307, %v2380
        %v2413 = vadd.f32 %v2308, %v2381
        %v2414 = vadd.f32 %v2309, %v2382
        %v2415 = vadd.f32 %v2310, %v2383
        %v2416 = vadd.f32 %v2311, %v2384
        %v2417 = vadd.f32 %v2312, %v2385
        %v2418 = vadd.f32 %v2313, %v2386
        %v2419 = vadd.f32 %v2314, %v2387
        %v2420 = vadd.f32 %v2315, %v2388
        %v2421 = vadd.f32 %v2316, %v2389
        %v2422 = vadd.f32 %v2317, %v2390
        %v2423 = vadd.f32 %v2318, %v2391
        %v2424 = vadd.f32 %v2319, %v2392
        %v2425 = vsub.f32 %v1453, %v1606
        %v2426 = vsub.f32 %v1454, %v1607
        %v2427 = vsub.f32 %v1455, %v1608
        %v2428 = vsub.f32 %v1456, %v1609
        %v2429 = vsub.f32 %v1457, %v1610
        %v2430 = vsub.f32 %v1458, %v1611
        %v2431 = vsub.f32 %v1459, %v1612
        %v2432 = vsub.f32 %v1460, %v1613
        %v2433 = vsub.f32 %v1461, %v1614
        %v2434 = vsub.f32 %v1462, %v1615
        %v2435 = vsub.f32 %v1463, %v1616
        %v2436 = vsub.f32 %v1464, %v1617
        %v2437 = vsub.f32 %v1465, %v1618
        %v2438 = vsub.f32 %v1466, %v1619
        %v2439 = vsub.f32 %v1467, %v1620
        %v2440 = vsub.f32 %v1468, %v1621
        %v2441 = vmul.f32 %v2425, 1.442695
        %v2442 = vpow.pop %v2441
        %v2443 = vmul.f32 %v2426, 1.442695
        %v2444 = vpow.pop %v2443
        %v2445 = vmul.f32 %v2427, 1.442695
        %v2446 = vpow.pop %v2445
        %v2447 = vmul.f32 %v2428, 1.442695
        %v2448 = vpow.pop %v2447
        %v2449 = vmul.f32 %v2429, 1.442695
        %v2450 = vpow.pop %v2449
        %v2451 = vmul.f32 %v2430, 1.442695
        %v2452 = vpow.pop %v2451
        %v2453 = vmul.f32 %v2431, 1.442695
        %v2454 = vpow.pop %v2453
        %v2455 = vmul.f32 %v2432, 1.442695
        %v2456 = vpow.pop %v2455
        %v2457 = vmul.f32 %v2433, 1.442695
        %v2458 = vpow.pop %v2457
        %v2459 = vmul.f32 %v2434, 1.442695
        %v2460 = vpow.pop %v2459
        %v2461 = vmul.f32 %v2435, 1.442695
        %v2462 = vpow.pop %v2461
        %v2463 = vmul.f32 %v2436, 1.442695
        %v2464 = vpow.pop %v2463
        %v2465 = vmul.f32 %v2437, 1.442695
        %v2466 = vpow.pop %v2465
        %v2467 = vmul.f32 %v2438, 1.442695
        %v2468 = vpow.pop %v2467
        %v2469 = vmul.f32 %v2439, 1.442695
        %v2470 = vpow.pop %v2469
        %v2471 = vmul.f32 %v2440, 1.442695
        %v2472 = vpow.pop %v2471
        %v2473 = vmul.f32 %v2442, %v592
        %v2474 = vmul.f32 %v2444, %v595
        %v2475 = vmul.f32 %v2446, %v601
        %v2476 = vmul.f32 %v2448, %v604
        %v2477 = vmul.f32 %v2450, %v610
        %v2478 = vmul.f32 %v2452, %v613
        %v2479 = vmul.f32 %v2454, %v619
        %v2480 = vmul.f32 %v2456, %v622
        %v2481 = vmul.f32 %v2458, %v628
        %v2482 = vmul.f32 %v2460, %v631
        %v2483 = vmul.f32 %v2462, %v637
        %v2484 = vmul.f32 %v2464, %v640
        %v2485 = vmul.f32 %v2466, %v646
        %v2486 = vmul.f32 %v2468, %v649
        %v2487 = vmul.f32 %v2470, %v655
        %v2488 = vmul.f32 %v2472, %v658
        %v2489 = vadd.f32 %v2393, %v2442
        %v2490 = vadd.f32 %v2394, %v2444
        %v2491 = vadd.f32 %v2395, %v2446
        %v2492 = vadd.f32 %v2396, %v2448
        %v2493 = vadd.f32 %v2397, %v2450
        %v2494 = vadd.f32 %v2398, %v2452
        %v2495 = vadd.f32 %v2399, %v2454
        %v2496 = vadd.f32 %v2400, %v2456
        %v2497 = vadd.f32 %v2401, %v2458
        %v2498 = vadd.f32 %v2402, %v2460
        %v2499 = vadd.f32 %v2403, %v2462
        %v2500 = vadd.f32 %v2404, %v2464
        %v2501 = vadd.f32 %v2405, %v2466
        %v2502 = vadd.f32 %v2406, %v2468
        %v2503 = vadd.f32 %v2407, %v2470
        %v2504 = vadd.f32 %v2408, %v2472
        %v2505 = vadd.f32 %v2409, %v2473
        %v2506 = vadd.f32 %v2410, %v2474
        %v2507 = vadd.f32 %v2411, %v2475
        %v2508 = vadd.f32 %v2412, %v2476
        %v2509 = vadd.f32 %v2413, %v2477
        %v2510 = vadd.f32 %v2414, %v2478
        %v2511 = vadd.f32 %v2415, %v2479
        %v2512 = vadd.f32 %v2416, %v2480
        %v2513 = vadd.f32 %v2417, %v2481
        %v2514 = vadd.f32 %v2418, %v2482
        %v2515 = vadd.f32 %v2419, %v2483
        %v2516 = vadd.f32 %v2420, %v2484
        %v2517 = vadd.f32 %v2421, %v2485
        %v2518 = vadd.f32 %v2422, %v2486
        %v2519 = vadd.f32 %v2423, %v2487
        %v2520 = vadd.f32 %v2424, %v2488
        %v2521 = vsub.f32 %v1590, %v1606
        %v2522 = vsub.f32 %v1591, %v1607
        %v2523 = vsub.f32 %v1592, %v1608
        %v2524 = vsub.f32 %v1593, %v1609
        %v2525 = vsub.f32 %v1594, %v1610
        %v2526 = vsub.f32 %v1595, %v1611
        %v2527 = vsub.f32 %v1596, %v1612
        %v2528 = vsub.f32 %v1597, %v1613
        %v2529 = vsub.f32 %v1598, %v1614
        %v2530 = vsub.f32 %v1599, %v1615
        %v2531 = vsub.f32 %v1600, %v1616
        %v2532 = vsub.f32 %v1601, %v1617
        %v2533 = vsub.f32 %v1602, %v1618
        %v2534 = vsub.f32 %v1603, %v1619
        %v2535 = vsub.f32 %v1604, %v1620
        %v2536 = vsub.f32 %v1605, %v1621
        %v2537 = vmul.f32 %v2521, 1.442695
        %v2538 = vpow.pop %v2537
        %v2539 = vmul.f32 %v2522, 1.442695
        %v2540 = vpow.pop %v2539
        %v2541 = vmul.f32 %v2523, 1.442695
        %v2542 = vpow.pop %v2541
        %v2543 = vmul.f32 %v2524, 1.442695
        %v2544 = vpow.pop %v2543
        %v2545 = vmul.f32 %v2525, 1.442695
        %v2546 = vpow.pop %v2545
        %v2547 = vmul.f32 %v2526, 1.442695
        %v2548 = vpow.pop %v2547
        %v2549 = vmul.f32 %v2527, 1.442695
        %v2550 = vpow.pop %v2549
        %v2551 = vmul.f32 %v2528, 1.442695
        %v2552 = vpow.pop %v2551
        %v2553 = vmul.f32 %v2529, 1.442695
        %v2554 = vpow.pop %v2553
        %v2555 = vmul.f32 %v2530, 1.442695
        %v2556 = vpow.pop %v2555
        %v2557 = vmul.f32 %v2531, 1.442695
        %v2558 = vpow.pop %v2557
        %v2559 = vmul.f32 %v2532, 1.442695
        %v2560 = vpow.pop %v2559
        %v2561 = vmul.f32 %v2533, 1.442695
        %v2562 = vpow.pop %v2561
        %v2563 = vmul.f32 %v2534, 1.442695
        %v2564 = vpow.pop %v2563
        %v2565 = vmul.f32 %v2535, 1.442695
        %v2566 = vpow.pop %v2565
        %v2567 = vmul.f32 %v2536, 1.442695
        %v2568 = vpow.pop %v2567
        %v2570 = vrot.slane %v655, 1
        %v2571 = vrot.slane %v658, 1
        %v2572 = vsel %vm887, %v2570, %v2571
        %v2573 = vrot.slane %v661, 1
        %v2574 = vsel %vm887, %v2571, %v2573
        %v2577 = vmul.f32 %v2538, %v1923
        %v2578 = vmul.f32 %v2540, %v1925
        %v2579 = vmul.f32 %v2542, %v1928
        %v2580 = vmul.f32 %v2544, %v1930
        %v2581 = vmul.f32 %v2546, %v1933
        %v2582 = vmul.f32 %v2548, %v1935
        %v2583 = vmul.f32 %v2550, %v1938
        %v2584 = vmul.f32 %v2552, %v1940
        %v2585 = vmul.f32 %v2554, %v1943
        %v2586 = vmul.f32 %v2556, %v1945
        %v2587 = vmul.f32 %v2558, %v1948
        %v2588 = vmul.f32 %v2560, %v1950
        %v2589 = vmul.f32 %v2562, %v2267
        %v2590 = vmul.f32 %v2564, %v2269
        %v2591 = vmul.f32 %v2566, %v2572
        %v2592 = vmul.f32 %v2568, %v2574
        %v2593 = vadd.f32 %v2489, %v2538
        %v2594 = vadd.f32 %v2490, %v2540
        %v2595 = vadd.f32 %v2491, %v2542
        %v2596 = vadd.f32 %v2492, %v2544
        %v2597 = vadd.f32 %v2493, %v2546
        %v2598 = vadd.f32 %v2494, %v2548
        %v2599 = vadd.f32 %v2495, %v2550
        %v2600 = vadd.f32 %v2496, %v2552
        %v2601 = vadd.f32 %v2497, %v2554
        %v2602 = vadd.f32 %v2498, %v2556
        %v2603 = vadd.f32 %v2499, %v2558
        %v2604 = vadd.f32 %v2500, %v2560
        %v2605 = vadd.f32 %v2501, %v2562
        %v2606 = vadd.f32 %v2502, %v2564
        %v2607 = vadd.f32 %v2503, %v2566
        %v2608 = vadd.f32 %v2504, %v2568
        %v2609 = vadd.f32 %v2505, %v2577
        %v2610 = vadd.f32 %v2506, %v2578
        %v2611 = vadd.f32 %v2507, %v2579
        %v2612 = vadd.f32 %v2508, %v2580
        %v2613 = vadd.f32 %v2509, %v2581
        %v2614 = vadd.f32 %v2510, %v2582
        %v2615 = vadd.f32 %v2511, %v2583
        %v2616 = vadd.f32 %v2512, %v2584
        %v2617 = vadd.f32 %v2513, %v2585
        %v2618 = vadd.f32 %v2514, %v2586
        %v2619 = vadd.f32 %v2515, %v2587
        %v2620 = vadd.f32 %v2516, %v2588
        %v2621 = vadd.f32 %v2517, %v2589
        %v2622 = vadd.f32 %v2518, %v2590
        %v2623 = vadd.f32 %v2519, %v2591
        %v2624 = vadd.f32 %v2520, %v2592
        %v2625 = vrcp.pop %v2593
        %v2626 = vrcp.pop %v2594
        %v2627 = vrcp.pop %v2595
        %v2628 = vrcp.pop %v2596
        %v2629 = vrcp.pop %v2597
        %v2630 = vrcp.pop %v2598
        %v2631 = vrcp.pop %v2599
        %v2632 = vrcp.pop %v2600
        %v2633 = vrcp.pop %v2601
        %v2634 = vrcp.pop %v2602
        %v2635 = vrcp.pop %v2603
        %v2636 = vrcp.pop %v2604
        %v2637 = vrcp.pop %v2605
        %v2638 = vrcp.pop %v2606
        %v2639 = vrcp.pop %v2607
        %v2640 = vrcp.pop %v2608
        %v2641 = vmul.f32 %v2609, %v2625
        %v2642 = vmul.f32 %v2610, %v2626
        %v2643 = vmul.f32 %v2611, %v2627
        %v2644 = vmul.f32 %v2612, %v2628
        %v2645 = vmul.f32 %v2613, %v2629
        %v2646 = vmul.f32 %v2614, %v2630
        %v2647 = vmul.f32 %v2615, %v2631
        %v2648 = vmul.f32 %v2616, %v2632
        %v2649 = vmul.f32 %v2617, %v2633
        %v2650 = vmul.f32 %v2618, %v2634
        %v2651 = vmul.f32 %v2619, %v2635
        %v2652 = vmul.f32 %v2620, %v2636
        %v2653 = vmul.f32 %v2621, %v2637
        %v2654 = vmul.f32 %v2622, %v2638
        %v2655 = vmul.f32 %v2623, %v2639
        %v2656 = vmul.f32 %v2624, %v2640
        %2657 = vst [vmem:[%s187] sm:$0xff] %v2641
        %2658 = vst [vmem:[%s187 + $0x8] sm:$0xff] %v2642
        %2659 = vst [vmem:[%s187 + $0x10] sm:$0xff] %v2643
        %2660 = vst [vmem:[%s187 + $0x18] sm:$0xff] %v2644
        %2661 = vst [vmem:[%s187 + $0x20] sm:$0xff] %v2645
        %2662 = vst [vmem:[%s187 + $0x28] sm:$0xff] %v2646
        %2663 = vst [vmem:[%s187 + $0x30] sm:$0xff] %v2647
        %2664 = vst [vmem:[%s187 + $0x38] sm:$0xff] %v2648
        %2665 = vst [vmem:[%s187 + $0x40] sm:$0xff] %v2649
        %2666 = vst [vmem:[%s187 + $0x48] sm:$0xff] %v2650
        %2667 = vst [vmem:[%s187 + $0x50] sm:$0xff] %v2651
        %2668 = vst [vmem:[%s187 + $0x58] sm:$0xff] %v2652
        %2669 = vst [vmem:[%s187 + $0x60] sm:$0xff] %v2653
        %2670 = vst [vmem:[%s187 + $0x68] sm:$0xff] %v2654
        %2671 = vst [vmem:[%s187 + $0x70] sm:$0xff] %v2655
        %2672 = vst [vmem:[%s187 + $0x78] sm:$0xff] %v2656
        %s2673 = sand.u32 %s109, 1
        %s2674 = scalar_lea.sflag [#allocation3], %s2673
        %s2675 = sand.u32 %s109, 1
        %s2676 = smul.addr %s2675, 128
        %s2677 = scalar_lea.vmem [#allocation2], %s2676
        // Predicated region
        $region33: #{attention_conv_forward.1} parent=31 // pred_check
          %p2678 = pneg %p119
        $region34: #{attention_conv_forward.1} parent=31 // pred_check_branch
          %2680 = sbr.rel (%p2678) target = $region36
        $region35: #{attention_conv_forward.1} parent=31 // pred_region
          %s2681 = smul.u32 8, %s22
          %2683 = vsyncadd %s2674, 0
          %s2684 = smul.addr %s2681, 2
          %s2685 = smul.addr %s21, 32
          %s2686 = sadd.s32 %s2684, %s2685
          %s2687 = smul.addr %s2686, 8
          %s2688 = scalar_lea.hbm %s3, %s2687
          %s2689 = sshll.u32 %s2677, 4
          %s2690 = int_to_ptr.vmem [resolvable:$true] %s2689
          %s2691 = sshll.u32 %s2688, 4
          %s2692 = int_to_ptr.hbm [resolvable:$true] %s2691
          %2697 = dma.vmem_to_hbm [thread:$0]  %s2690, 2048, %s2692, %s2674, 128, 128, 8
        $region36: #{attention_conv_forward.1} parent=31 // pred_fallthru
          _
      $region32: #{attention_conv_forward.1} parent=5 // pred_fallthru
        _
      %p2698 = scmp.le.s32.totalorder 2, %s12
      // Predicated region
      $region37: #{attention_conv_forward.1} parent=5 // pred_check
        %p2699 = pneg %p2698
      $region38: #{attention_conv_forward.1} parent=5 // pred_check_branch
        %2701 = sbr.rel (%p2699) target = $region40
      $region39: #{attention_conv_forward.1} parent=5 // pred_region
        %s2702 = ssub.s32 %s12, 2
        // Predicated region
        $region41: #{attention_conv_forward.1} parent=39 // pred_check
          %p2703 = pneg %p125
        $region42: #{attention_conv_forward.1} parent=39 // pred_check_branch
          %2705 = sbr.rel (%p2703) target = $region44
        $region43: #{attention_conv_forward.1} parent=39 // pred_region
          %s2706 = sand.u32 %s110, 1
          %s2707 = scalar_lea.sflag [#allocation3], %s2706
          %s2708 = sand.u32 %s110, 1
          %s2709 = smul.addr %s2708, 128
          %s2710 = scalar_lea.vmem [#allocation2], %s2709
          %2712 = dma.done %s2707, 2048
        $region44: #{attention_conv_forward.1} parent=39 // pred_fallthru
          _
      $region40: #{attention_conv_forward.1} parent=5 // pred_fallthru
        _
    $region6: #{attention_conv_forward.1} parent=1 // loop_footer
      %s16 = sadd.s32 1, %s12
    $region7: #{attention_conv_forward.1} parent=1 // loop_footer_branch
      %11 = sbr.rel target = $region3
    $region8: #{attention_conv_forward.1} parent=1 // loop_exit
      _
    %2713 = vsyncpa [#allocation3], 1
    %s2714 = scalar_lea.sflag [#allocation3], 1
    %2715 = vsyncpa %s2714, 1

</llo_original>
